<compile_context>
chip_gen: v5e
topology: v5e:2x2
jax: 0.10.0
libtpu: 0.0.40
codegen_flags: <defaults>
</compile_context>

<pallas_src>
import jax
import jax.numpy as jnp
from jax import lax
from jax.experimental import pallas as pl
from jax.experimental.pallas import tpu as pltpu


def _round_up(a, b):
    return ((a + b - 1) // b) * b


def _chip_budgets():
    """(x-tile byte budget per pipeline buffer, scoped-VMEM limit) per TPU gen."""
    try:
        kind = jax.devices()[0].device_kind.lower()
    except Exception:
        kind = ""
    if ("v5 lite" in kind) or ("v5lite" in kind) or ("v5e" in kind):
        return 6 << 20, 100 << 20     # v5e: 16 MiB default scope, 128 MiB physical
    if ("v6" in kind) or ("trillium" in kind):
        return 16 << 20, 64 << 20     # v6e: 128 MiB physical VMEM
    if "v7" in kind:
        return 12 << 20, 48 << 20     # v7x: only 64 MiB VMEM per TensorCore
    return 8 << 20, 64 << 20          # conservative default for unknown chips


def _make_kernel(chunk):
    def linear_kernel(x_ref, w_ref, b_ref, o_ref):
        # x_ref: (tb, D) VMEM   w_ref: (1, D) VMEM (same block every step -> resident)
        # b_ref: (1,) f32 SMEM  o_ref: (1, 1, tb) lane-dense output row
        w = w_ref[...].astype(jnp.float32)        # hoisted: broadcast row, loaded once
        bias = b_ref[0]
        n_chunks = x_ref.shape[0] // chunk        # static trip count

        def body(c, carry):
            off = pl.multiple_of(c * chunk, chunk)
            xc = x_ref[pl.ds(off, chunk), :].astype(jnp.float32)   # (chunk, D)
            acc = jnp.sum(xc * w, axis=-1) + bias                  # VPU mul + XLU reduce
            o_ref[0, 0, pl.ds(off, chunk)] = acc.astype(o_ref.dtype)
            return carry

        lax.fori_loop(0, n_chunks, body, 0, unroll=False)

    return linear_kernel


def linear_regression_forward(x, weight, bias, *, x_budget_bytes=None):
    """x: (B, D); weight: (1, D) (PyTorch nn.Linear layout); bias: (1,). Returns (B,)."""
    B, D = x.shape
    out_dtype = x.dtype
    itemsize = jnp.dtype(x.dtype).itemsize

    budget, vmem_limit = _chip_budgets()
    if x_budget_bytes is not None:
        budget = int(x_budget_bytes)

    bytes_per_row = max(D * itemsize, 1)
    rows_budget = budget // bytes_per_row

    # Fallback: tiny inputs (launch overhead > HBM time) or D too wide for even a
    # minimal row-chunk tile (no D-axis tiling implemented).
    # TODO(synk): add a second grid axis over D for extremely wide inputs.
    if (B * D * itemsize < 256 * 1024) or (rows_budget < 128):
        return (x @ weight.T + bias).reshape(-1).astype(out_dtype)

    # Row chunk: multiple of every dtype's sublane tile (8/16/32) and of 128 lanes.
    chunk = 512 if rows_budget >= 512 else 128

    # Batch tile from the byte budget, never (much) larger than B itself.
    tb = (rows_budget // chunk) * chunk
    tb = min(tb, _round_up(B, chunk))
    tb = max(tb, chunk)

    g = -(-B // tb)
    if g > 1 and g % 2 == 1:
        # Even grid length -> v7x's two TensorCores split the parallel axis evenly.
        tb2 = _round_up(-(-B // (g + 1)), chunk)
        if chunk <= tb2 <= tb:
            tb = tb2
            g = -(-B // tb)

    b_smem = bias.reshape(1).astype(jnp.float32)

    out = pl.pallas_call(
        _make_kernel(chunk),
        out_shape=jax.ShapeDtypeStruct((g, 1, tb), out_dtype),
        grid=(g,),
        in_specs=[
            pl.BlockSpec((tb, D), lambda i: (i, 0)),                # x tile (partial last block)
            pl.BlockSpec((1, D), lambda i: (0, 0)),                 # weight row, resident
            pl.BlockSpec(memory_space=pltpu.MemorySpace.SMEM),      # bias scalar
        ],
        out_specs=pl.BlockSpec((1, 1, tb), lambda i: (i, 0, 0)),    # lane-dense row per step
        compiler_params=pltpu.CompilerParams(
            dimension_semantics=("parallel",),
            vmem_limit_bytes=vmem_limit,
        ),
        cost_estimate=pl.CostEstimate(
            flops=2 * B * D,
            transcendentals=0,
            bytes_accessed=B * D * itemsize + D * itemsize
            + B * jnp.dtype(out_dtype).itemsize,
        ),
    )(x, weight, b_smem)

    return out.reshape(-1)[:B]


if __name__ == "__main__":
    key = jax.random.PRNGKey(0)
    kx, kw, kb, kx2, kw2, kb2 = jax.random.split(key, 6)

    # --- Test 1: Pallas path, single grid step with a partial block (B % tb != 0) ---
    batch, input_size = 2051, 256
    x = jax.random.normal(kx, (batch, input_size), dtype=jnp.float32)
    weight = jax.random.normal(kw, (1, input_size), dtype=jnp.float32) * 0.5
    bias = jax.random.normal(kb, (1,), dtype=jnp.float32) * 0.1
    y_ref = (x @ weight.T + bias).reshape(-1)

    y = jax.block_until_ready(linear_regression_forward(x, weight, bias))
    assert y.shape == (batch,)
    assert jnp.allclose(y, y_ref, atol=1e-4, rtol=1e-4)

    # --- Test 2: Pallas path, forced small tile budget -> multi-step grid ---
    y_small = jax.block_until_ready(
        linear_regression_forward(x, weight, bias, x_budget_bytes=600 * 1024)
    )
    assert y_small.shape == (batch,)
    assert jnp.allclose(y_small, y_ref, atol=1e-4, rtol=1e-4)

    # --- Test 3: module default shapes (input_size=1, batch=8) -> XLA fallback ---
    batch2, input_size2 = 8, 1
    x2 = jax.random.normal(kx2, (batch2, input_size2), dtype=jnp.float32)
    weight2 = jax.random.normal(kw2, (1, input_size2), dtype=jnp.float32) * 0.5
    bias2 = jax.random.normal(kb2, (1,), dtype=jnp.float32) * 0.1

    y2 = jax.block_until_ready(linear_regression_forward(x2, weight2, bias2))
    y2_ref = (x2 @ weight2.T + bias2).reshape(-1)
    assert y2.shape == (batch2,)
    assert jnp.allclose(y2, y2_ref, atol=1e-5, rtol=1e-5)

    print("KERNEL_OK")
</pallas_src>

<mosaic_0001>
module attributes {stable_mosaic.version = 11 : i64} {
  func.func @linear_kernel(%arg0: i32, %arg1: memref<2560x256xf32, #tpu.memory_space<vmem>>, %arg2: memref<1x256xf32, #tpu.memory_space<vmem>>, %arg3: memref<1xf32, #tpu.memory_space<smem>>, %arg4: memref<1x1x2560xf32, #tpu.memory_space<vmem>>) attributes {dimension_semantics = [#tpu.dimension_semantics<parallel>], iteration_bounds = array<i64: 1>, scalar_prefetch = 0 : i64, scratch_operands = 0 : i64, tpu.core_type = #tpu.core_type<tc>, window_params = [{transform_indices = @transform_0, window_bounds = array<i64: 2560, 256>}, {pipeline_mode = #tpu.pipeline_mode<synchronous>, transform_indices = @transform_1, window_bounds = array<i64: 1, 256>}, {transform_indices = @transform_2, window_bounds = array<i64: 1>}, {transform_indices = @transform_3, window_bounds = array<i64: 1, 1, 2560>}]} {
    %c0 = arith.constant 0 : index
    %c0_0 = arith.constant 0 : index
    %0 = vector.load %arg2[%c0, %c0_0] : memref<1x256xf32, #tpu.memory_space<vmem>>, vector<1x256xf32>
    %c0_1 = arith.constant 0 : index
    %1 = memref.load %arg3[%c0_1] : memref<1xf32, #tpu.memory_space<smem>>
    %c0_i32 = arith.constant 0 : i32
    %c5_i32 = arith.constant 5 : i32
    %2 = arith.addi %c0_i32, %c5_i32 : i32
    %c1_i32 = arith.constant 1 : i32
    scf.for %arg5 = %c0_i32 to %2 step %c1_i32  : i32 {
      %c512_i32 = arith.constant 512 : i32
      %3 = arith.muli %arg5, %c512_i32 : i32
      %4 = tpu.assume_multiple %3, 512 : i32
      %5 = arith.index_cast %4 : i32 to index
      %c0_3 = arith.constant 0 : index
      %6 = vector.load %arg1[%5, %c0_3] : memref<2560x256xf32, #tpu.memory_space<vmem>>, vector<512x256xf32>
      %7 = vector.broadcast %0 : vector<1x256xf32> to vector<512x256xf32>
      %8 = arith.mulf %6, %7 : vector<512x256xf32>
      %cst = arith.constant dense<0.000000e+00> : vector<512xf32>
      %9 = vector.multi_reduction <add>, %8, %cst [1] : vector<512x256xf32> to vector<512xf32>
      %10 = vector.broadcast %1 : f32 to vector<512xf32>
      %11 = arith.addf %9, %10 : vector<512xf32>
      %c0_4 = arith.constant 0 : index
      %c0_5 = arith.constant 0 : index
      %12 = arith.index_cast %4 : i32 to index
      %13 = vector.load %arg4[%c0_4, %c0_5, %12] : memref<1x1x2560xf32, #tpu.memory_space<vmem>>, vector<1x1x512xf32>
      %14 = vector.shape_cast %13 : vector<1x1x512xf32> to vector<512xf32>
      %15 = vector.shape_cast %11 : vector<512xf32> to vector<1x1x512xf32>
      tpu.vector_store %arg4[%c0_4, %c0_5, %12], %15 {strides = array<i32>} : memref<1x1x2560xf32, #tpu.memory_space<vmem>>, vector<1x1x512xf32>,
    }
    %c5_i32_2 = arith.constant 5 : i32
    return
  }
  func.func @transform_0(%arg0: i32) -> (i32, i32) {
    %c0_i32 = arith.constant 0 : i32
    %c0_i32_0 = arith.constant 0 : i32
    return %arg0, %c0_i32 : i32, i32
  }
  func.func @transform_1(%arg0: i32) -> (i32, i32) {
    %c0_i32 = arith.constant 0 : i32
    %c0_i32_0 = arith.constant 0 : i32
    %c0_i32_1 = arith.constant 0 : i32
    return %c0_i32, %c0_i32_0 : i32, i32
  }
  func.func @transform_2(%arg0: i32) -> i32 {
    %c0_i32 = arith.constant 0 : i32
    %c0_i32_0 = arith.constant 0 : i32
    return %c0_i32 : i32
  }
  func.func @transform_3(%arg0: i32) -> (i32, i32, i32) {
    %c0_i32 = arith.constant 0 : i32
    %c0_i32_0 = arith.constant 0 : i32
    %c0_i32_1 = arith.constant 0 : i32
    return %arg0, %c0_i32, %c0_i32_0 : i32, i32, i32
  }
}

</mosaic_0001>

<llo_original>
// kernel: tpu_custom_call.1
$region0: #{tpu_custom_call.1}
  #allocation0 [shape = 'u32[]', space=smem, size = 0x4, offset = 0x4, fixed_abs, tag = 'smem constant byte address 0x4 - core index']
  #allocation1 [shape = 'u32[72,128]{1,0:T(1,128)}', space=vmem, size = 0x9000, scoped, tag = 'internal scratch']
  #allocation2 [shape = 'f32[1]{0:T(128)S(6)}', space=smem, size = 0x200, scoped, tag = 'scoped memory for tpu_custom_call.1']
  %s0 = inlined_call_operand.hbm [shape: f32[2051,256], index: 0, kind: input, shape index: {}]
  %s1 = inlined_call_operand.hbm [shape: f32[1,256], index: 1, kind: input, shape index: {}]
  %s2 = inlined_call_operand.<no memory space> [shape: f32[1], index: 2, kind: input, shape index: {}]
  %s3 = inlined_call_operand.hbm [shape: f32[1,1,2560], index: 3, kind: output, shape index: {}]
  %s4 = sld [smem:[#allocation0]]
  $region37: #{tpu_custom_call.1} parent=0
    _
  %s6 = ssub.s32 1, %s4
  %s7 = scalar_select 0, %s6, %s4
  %8 = sst [smem:[#allocation2]] %s2
  $region1: #{tpu_custom_call.1} parent=0
    #allocation3 [shape = 'u8[2621440]{0}', space=vmem, size = 0x280000, scoped, tag = 'input window, operand 0, single buffered']
    #allocation4 [shape = 's32[1]{0}', space=sflag, size = 0x4, scoped, tag = 'scoped memory for tpu_custom_call.1']
    #allocation5 [shape = 's32[1]{0}', space=sflag, size = 0x4, scoped, tag = 'scoped memory for tpu_custom_call.1']
    #allocation6 [shape = 'u8[1024]{0}', space=vmem, size = 0x400, scoped, tag = 'input window, operand 1, single buffered']
    #allocation7 [shape = 's32[1]{0}', space=sflag, size = 0x4, scoped, tag = 'scoped memory for tpu_custom_call.1']
    #allocation8 [shape = 'u8[10240]{0}', space=vmem, size = 0x2800, scoped, tag = 'output window, operand 0, single buffered']
    %9 = vsyncpa [#allocation4], 0
    %10 = vsyncpa [#allocation7], 0
    %11 = vsyncpa [#allocation5], 0
    // Predicated region
    $region2: #{tpu_custom_call.1} parent=1 // pred_check
      _
    $region3: #{tpu_custom_call.1} parent=1 // pred_check_branch
      %13 = sbr.rel (0) target = $region5
    $region4: #{tpu_custom_call.1} parent=1 // pred_region
      %15 = vsyncadd [#allocation4], 16128
      %s16 = sshll.u32 %s0, 4
      %s17 = int_to_ptr.hbm [resolvable:$true] %s16
      %s18 = sshll.u32 [#allocation3], 4
      %s19 = int_to_ptr.vmem [resolvable:$true] %s18
      %24 = dma.hbm_to_vmem [thread:$0]  %s17, 65792, %s19, [#allocation4], 256, 256, 16
    $region5: #{tpu_custom_call.1} parent=1 // pred_fallthru
      _
    // Predicated region
    $region6: #{tpu_custom_call.1} parent=1 // pred_check
      _
    $region7: #{tpu_custom_call.1} parent=1 // pred_check_branch
      %26 = sbr.rel (0) target = $region9
    $region8: #{tpu_custom_call.1} parent=1 // pred_region
      %28 = vsyncadd [#allocation7], 0
      %s30 = sshll.u32 %s1, 4
      %s31 = int_to_ptr.hbm [resolvable:$true] %s30
      %s32 = sshll.u32 [#allocation6], 4
      %s33 = int_to_ptr.vmem [resolvable:$true] %s32
      %35 = dma.hbm_to_vmem [thread:$0]  %s31, 32, %s33, [#allocation7]
    $region9: #{tpu_custom_call.1} parent=1 // pred_fallthru
      _
    // Predicated region
    $region10: #{tpu_custom_call.1} parent=1 // pred_check
      _
    $region11: #{tpu_custom_call.1} parent=1 // pred_check_branch
      %37 = sbr.rel (0) target = $region13
    $region12: #{tpu_custom_call.1} parent=1 // pred_region
      _
    $region13: #{tpu_custom_call.1} parent=1 // pred_fallthru
      _
    // Predicated region
    $region14: #{tpu_custom_call.1} parent=1 // pred_check
      _
    $region15: #{tpu_custom_call.1} parent=1 // pred_check_branch
      %39 = sbr.rel (0) target = $region17
    $region16: #{tpu_custom_call.1} parent=1 // pred_region
      %41 = dma.done [#allocation4], 81920
    $region17: #{tpu_custom_call.1} parent=1 // pred_fallthru
      _
    // Predicated region
    $region18: #{tpu_custom_call.1} parent=1 // pred_check
      _
    $region19: #{tpu_custom_call.1} parent=1 // pred_check_branch
      %43 = sbr.rel (0) target = $region21
    $region20: #{tpu_custom_call.1} parent=1 // pred_region
      %45 = dma.done [#allocation7], 32
    $region21: #{tpu_custom_call.1} parent=1 // pred_fallthru
      _
    %v46 = vld [vmem:[#allocation6] sm:$0x3]
    %s47 = sld [smem:[#allocation2]]
    loop: start=0, step=1, limit=5
    $region22: #{tpu_custom_call.1} parent=1 // loop_pre_header
      _
    $region23: #{tpu_custom_call.1} parent=1 // loop_header
      %s49 = sphi 0, %s53
      %p50 = scmp.ge.s32.totalorder %s49, 5
    $region24: #{tpu_custom_call.1} parent=1 // loop_header_branch
      %52 = sbr.rel (%p50) target = $region28
    $region25: #{tpu_custom_call.1} parent=1 // loop_body
      %s54 = smul.u32 %s49, 512
      %s55 = sshra.s32 %s54, 3
      %s56 = sand.u32 %s54, 7
      %s57 = smul.u32 %s55, 2
      %s58 = smul.addr %s57, 8
      %s59 = scalar_lea.vmem [#allocation3], %s58
      %v60 = vld [vmem:[%s59] sm:$0xff]
      %v61 = vld [vmem:[%s59 + $0x8] sm:$0xff]
      %v62 = vld [vmem:[%s59 + $0x10] sm:$0xff]
      %v63 = vld [vmem:[%s59 + $0x18] sm:$0xff]
      %v64 = vld [vmem:[%s59 + $0x20] sm:$0xff]
      %v65 = vld [vmem:[%s59 + $0x28] sm:$0xff]
      %v66 = vld [vmem:[%s59 + $0x30] sm:$0xff]
      %v67 = vld [vmem:[%s59 + $0x38] sm:$0xff]
      %v68 = vld [vmem:[%s59 + $0x40] sm:$0xff]
      %v69 = vld [vmem:[%s59 + $0x48] sm:$0xff]
      %v70 = vld [vmem:[%s59 + $0x50] sm:$0xff]
      %v71 = vld [vmem:[%s59 + $0x58] sm:$0xff]
      %v72 = vld [vmem:[%s59 + $0x60] sm:$0xff]
      %v73 = vld [vmem:[%s59 + $0x68] sm:$0xff]
      %v74 = vld [vmem:[%s59 + $0x70] sm:$0xff]
      %v75 = vld [vmem:[%s59 + $0x78] sm:$0xff]
      %v76 = vld [vmem:[%s59 + $0x80] sm:$0xff]
      %v77 = vld [vmem:[%s59 + $0x88] sm:$0xff]
      %v78 = vld [vmem:[%s59 + $0x90] sm:$0xff]
      %v79 = vld [vmem:[%s59 + $0x98] sm:$0xff]
      %v80 = vld [vmem:[%s59 + $0xa0] sm:$0xff]
      %v81 = vld [vmem:[%s59 + $0xa8] sm:$0xff]
      %v82 = vld [vmem:[%s59 + $0xb0] sm:$0xff]
      %v83 = vld [vmem:[%s59 + $0xb8] sm:$0xff]
      %v84 = vld [vmem:[%s59 + $0xc0] sm:$0xff]
      %v85 = vld [vmem:[%s59 + $0xc8] sm:$0xff]
      %v86 = vld [vmem:[%s59 + $0xd0] sm:$0xff]
      %v87 = vld [vmem:[%s59 + $0xd8] sm:$0xff]
      %v88 = vld [vmem:[%s59 + $0xe0] sm:$0xff]
      %v89 = vld [vmem:[%s59 + $0xe8] sm:$0xff]
      %v90 = vld [vmem:[%s59 + $0xf0] sm:$0xff]
      %v91 = vld [vmem:[%s59 + $0xf8] sm:$0xff]
      %v92 = vld [vmem:[%s59 + $0x100] sm:$0xff]
      %v93 = vld [vmem:[%s59 + $0x108] sm:$0xff]
      %v94 = vld [vmem:[%s59 + $0x110] sm:$0xff]
      %v95 = vld [vmem:[%s59 + $0x118] sm:$0xff]
      %v96 = vld [vmem:[%s59 + $0x120] sm:$0xff]
      %v97 = vld [vmem:[%s59 + $0x128] sm:$0xff]
      %v98 = vld [vmem:[%s59 + $0x130] sm:$0xff]
      %v99 = vld [vmem:[%s59 + $0x138] sm:$0xff]
      %v100 = vld [vmem:[%s59 + $0x140] sm:$0xff]
      %v101 = vld [vmem:[%s59 + $0x148] sm:$0xff]
      %v102 = vld [vmem:[%s59 + $0x150] sm:$0xff]
      %v103 = vld [vmem:[%s59 + $0x158] sm:$0xff]
      %v104 = vld [vmem:[%s59 + $0x160] sm:$0xff]
      %v105 = vld [vmem:[%s59 + $0x168] sm:$0xff]
      %v106 = vld [vmem:[%s59 + $0x170] sm:$0xff]
      %v107 = vld [vmem:[%s59 + $0x178] sm:$0xff]
      %v108 = vld [vmem:[%s59 + $0x180] sm:$0xff]
      %v109 = vld [vmem:[%s59 + $0x188] sm:$0xff]
      %v110 = vld [vmem:[%s59 + $0x190] sm:$0xff]
      %v111 = vld [vmem:[%s59 + $0x198] sm:$0xff]
      %v112 = vld [vmem:[%s59 + $0x1a0] sm:$0xff]
      %v113 = vld [vmem:[%s59 + $0x1a8] sm:$0xff]
      %v114 = vld [vmem:[%s59 + $0x1b0] sm:$0xff]
      %v115 = vld [vmem:[%s59 + $0x1b8] sm:$0xff]
      %v116 = vld [vmem:[%s59 + $0x1c0] sm:$0xff]
      %v117 = vld [vmem:[%s59 + $0x1c8] sm:$0xff]
      %v118 = vld [vmem:[%s59 + $0x1d0] sm:$0xff]
      %v119 = vld [vmem:[%s59 + $0x1d8] sm:$0xff]
      %v120 = vld [vmem:[%s59 + $0x1e0] sm:$0xff]
      %v121 = vld [vmem:[%s59 + $0x1e8] sm:$0xff]
      %v122 = vld [vmem:[%s59 + $0x1f0] sm:$0xff]
      %v123 = vld [vmem:[%s59 + $0x1f8] sm:$0xff]
      %v124 = vld [vmem:[%s59 + $0x200] sm:$0xff]
      %v125 = vld [vmem:[%s59 + $0x208] sm:$0xff]
      %v126 = vld [vmem:[%s59 + $0x210] sm:$0xff]
      %v127 = vld [vmem:[%s59 + $0x218] sm:$0xff]
      %v128 = vld [vmem:[%s59 + $0x220] sm:$0xff]
      %v129 = vld [vmem:[%s59 + $0x228] sm:$0xff]
      %v130 = vld [vmem:[%s59 + $0x230] sm:$0xff]
      %v131 = vld [vmem:[%s59 + $0x238] sm:$0xff]
      %v132 = vld [vmem:[%s59 + $0x240] sm:$0xff]
      %v133 = vld [vmem:[%s59 + $0x248] sm:$0xff]
      %v134 = vld [vmem:[%s59 + $0x250] sm:$0xff]
      %v135 = vld [vmem:[%s59 + $0x258] sm:$0xff]
      %v136 = vld [vmem:[%s59 + $0x260] sm:$0xff]
      %v137 = vld [vmem:[%s59 + $0x268] sm:$0xff]
      %v138 = vld [vmem:[%s59 + $0x270] sm:$0xff]
      %v139 = vld [vmem:[%s59 + $0x278] sm:$0xff]
      %v140 = vld [vmem:[%s59 + $0x280] sm:$0xff]
      %v141 = vld [vmem:[%s59 + $0x288] sm:$0xff]
      %v142 = vld [vmem:[%s59 + $0x290] sm:$0xff]
      %v143 = vld [vmem:[%s59 + $0x298] sm:$0xff]
      %v144 = vld [vmem:[%s59 + $0x2a0] sm:$0xff]
      %v145 = vld [vmem:[%s59 + $0x2a8] sm:$0xff]
      %v146 = vld [vmem:[%s59 + $0x2b0] sm:$0xff]
      %v147 = vld [vmem:[%s59 + $0x2b8] sm:$0xff]
      %v148 = vld [vmem:[%s59 + $0x2c0] sm:$0xff]
      %v149 = vld [vmem:[%s59 + $0x2c8] sm:$0xff]
      %v150 = vld [vmem:[%s59 + $0x2d0] sm:$0xff]
      %v151 = vld [vmem:[%s59 + $0x2d8] sm:$0xff]
      %v152 = vld [vmem:[%s59 + $0x2e0] sm:$0xff]
      %v153 = vld [vmem:[%s59 + $0x2e8] sm:$0xff]
      %v154 = vld [vmem:[%s59 + $0x2f0] sm:$0xff]
      %v155 = vld [vmem:[%s59 + $0x2f8] sm:$0xff]
      %v156 = vld [vmem:[%s59 + $0x300] sm:$0xff]
      %v157 = vld [vmem:[%s59 + $0x308] sm:$0xff]
      %v158 = vld [vmem:[%s59 + $0x310] sm:$0xff]
      %v159 = vld [vmem:[%s59 + $0x318] sm:$0xff]
      %v160 = vld [vmem:[%s59 + $0x320] sm:$0xff]
      %v161 = vld [vmem:[%s59 + $0x328] sm:$0xff]
      %v162 = vld [vmem:[%s59 + $0x330] sm:$0xff]
      %v163 = vld [vmem:[%s59 + $0x338] sm:$0xff]
      %v164 = vld [vmem:[%s59 + $0x340] sm:$0xff]
      %v165 = vld [vmem:[%s59 + $0x348] sm:$0xff]
      %v166 = vld [vmem:[%s59 + $0x350] sm:$0xff]
      %v167 = vld [vmem:[%s59 + $0x358] sm:$0xff]
      %v168 = vld [vmem:[%s59 + $0x360] sm:$0xff]
      %v169 = vld [vmem:[%s59 + $0x368] sm:$0xff]
      %v170 = vld [vmem:[%s59 + $0x370] sm:$0xff]
      %v171 = vld [vmem:[%s59 + $0x378] sm:$0xff]
      %v172 = vld [vmem:[%s59 + $0x380] sm:$0xff]
      %v173 = vld [vmem:[%s59 + $0x388] sm:$0xff]
      %v174 = vld [vmem:[%s59 + $0x390] sm:$0xff]
      %v175 = vld [vmem:[%s59 + $0x398] sm:$0xff]
      %v176 = vld [vmem:[%s59 + $0x3a0] sm:$0xff]
      %v177 = vld [vmem:[%s59 + $0x3a8] sm:$0xff]
      %v178 = vld [vmem:[%s59 + $0x3b0] sm:$0xff]
      %v179 = vld [vmem:[%s59 + $0x3b8] sm:$0xff]
      %v180 = vld [vmem:[%s59 + $0x3c0] sm:$0xff]
      %v181 = vld [vmem:[%s59 + $0x3c8] sm:$0xff]
      %v182 = vld [vmem:[%s59 + $0x3d0] sm:$0xff]
      %v183 = vld [vmem:[%s59 + $0x3d8] sm:$0xff]
      %v184 = vld [vmem:[%s59 + $0x3e0] sm:$0xff]
      %v185 = vld [vmem:[%s59 + $0x3e8] sm:$0xff]
      %v186 = vld [vmem:[%s59 + $0x3f0] sm:$0xff]
      %v187 = vld [vmem:[%s59 + $0x3f8] sm:$0xff]
      %v189 = vperm.slane %v46, 0
      %v190 = vperm.slane %v46, 1
      %v193 = vmul.f32 %v60, %v189
      %v194 = vmul.f32 %v61, %v190
      %v195 = vmul.f32 %v62, %v189
      %v196 = vmul.f32 %v63, %v190
      %v197 = vmul.f32 %v64, %v189
      %v198 = vmul.f32 %v65, %v190
      %v199 = vmul.f32 %v66, %v189
      %v200 = vmul.f32 %v67, %v190
      %v201 = vmul.f32 %v68, %v189
      %v202 = vmul.f32 %v69, %v190
      %v203 = vmul.f32 %v70, %v189
      %v204 = vmul.f32 %v71, %v190
      %v205 = vmul.f32 %v72, %v189
      %v206 = vmul.f32 %v73, %v190
      %v207 = vmul.f32 %v74, %v189
      %v208 = vmul.f32 %v75, %v190
      %v209 = vmul.f32 %v76, %v189
      %v210 = vmul.f32 %v77, %v190
      %v211 = vmul.f32 %v78, %v189
      %v212 = vmul.f32 %v79, %v190
      %v213 = vmul.f32 %v80, %v189
      %v214 = vmul.f32 %v81, %v190
      %v215 = vmul.f32 %v82, %v189
      %v216 = vmul.f32 %v83, %v190
      %v217 = vmul.f32 %v84, %v189
      %v218 = vmul.f32 %v85, %v190
      %v219 = vmul.f32 %v86, %v189
      %v220 = vmul.f32 %v87, %v190
      %v221 = vmul.f32 %v88, %v189
      %v222 = vmul.f32 %v89, %v190
      %v223 = vmul.f32 %v90, %v189
      %v224 = vmul.f32 %v91, %v190
      %v225 = vmul.f32 %v92, %v189
      %v226 = vmul.f32 %v93, %v190
      %v227 = vmul.f32 %v94, %v189
      %v228 = vmul.f32 %v95, %v190
      %v229 = vmul.f32 %v96, %v189
      %v230 = vmul.f32 %v97, %v190
      %v231 = vmul.f32 %v98, %v189
      %v232 = vmul.f32 %v99, %v190
      %v233 = vmul.f32 %v100, %v189
      %v234 = vmul.f32 %v101, %v190
      %v235 = vmul.f32 %v102, %v189
      %v236 = vmul.f32 %v103, %v190
      %v237 = vmul.f32 %v104, %v189
      %v238 = vmul.f32 %v105, %v190
      %v239 = vmul.f32 %v106, %v189
      %v240 = vmul.f32 %v107, %v190
      %v241 = vmul.f32 %v108, %v189
      %v242 = vmul.f32 %v109, %v190
      %v243 = vmul.f32 %v110, %v189
      %v244 = vmul.f32 %v111, %v190
      %v245 = vmul.f32 %v112, %v189
      %v246 = vmul.f32 %v113, %v190
      %v247 = vmul.f32 %v114, %v189
      %v248 = vmul.f32 %v115, %v190
      %v249 = vmul.f32 %v116, %v189
      %v250 = vmul.f32 %v117, %v190
      %v251 = vmul.f32 %v118, %v189
      %v252 = vmul.f32 %v119, %v190
      %v253 = vmul.f32 %v120, %v189
      %v254 = vmul.f32 %v121, %v190
      %v255 = vmul.f32 %v122, %v189
      %v256 = vmul.f32 %v123, %v190
      %v257 = vmul.f32 %v124, %v189
      %v258 = vmul.f32 %v125, %v190
      %v259 = vmul.f32 %v126, %v189
      %v260 = vmul.f32 %v127, %v190
      %v261 = vmul.f32 %v128, %v189
      %v262 = vmul.f32 %v129, %v190
      %v263 = vmul.f32 %v130, %v189
      %v264 = vmul.f32 %v131, %v190
      %v265 = vmul.f32 %v132, %v189
      %v266 = vmul.f32 %v133, %v190
      %v267 = vmul.f32 %v134, %v189
      %v268 = vmul.f32 %v135, %v190
      %v269 = vmul.f32 %v136, %v189
      %v270 = vmul.f32 %v137, %v190
      %v271 = vmul.f32 %v138, %v189
      %v272 = vmul.f32 %v139, %v190
      %v273 = vmul.f32 %v140, %v189
      %v274 = vmul.f32 %v141, %v190
      %v275 = vmul.f32 %v142, %v189
      %v276 = vmul.f32 %v143, %v190
      %v277 = vmul.f32 %v144, %v189
      %v278 = vmul.f32 %v145, %v190
      %v279 = vmul.f32 %v146, %v189
      %v280 = vmul.f32 %v147, %v190
      %v281 = vmul.f32 %v148, %v189
      %v282 = vmul.f32 %v149, %v190
      %v283 = vmul.f32 %v150, %v189
      %v284 = vmul.f32 %v151, %v190
      %v285 = vmul.f32 %v152, %v189
      %v286 = vmul.f32 %v153, %v190
      %v287 = vmul.f32 %v154, %v189
      %v288 = vmul.f32 %v155, %v190
      %v289 = vmul.f32 %v156, %v189
      %v290 = vmul.f32 %v157, %v190
      %v291 = vmul.f32 %v158, %v189
      %v292 = vmul.f32 %v159, %v190
      %v293 = vmul.f32 %v160, %v189
      %v294 = vmul.f32 %v161, %v190
      %v295 = vmul.f32 %v162, %v189
      %v296 = vmul.f32 %v163, %v190
      %v297 = vmul.f32 %v164, %v189
      %v298 = vmul.f32 %v165, %v190
      %v299 = vmul.f32 %v166, %v189
      %v300 = vmul.f32 %v167, %v190
      %v301 = vmul.f32 %v168, %v189
      %v302 = vmul.f32 %v169, %v190
      %v303 = vmul.f32 %v170, %v189
      %v304 = vmul.f32 %v171, %v190
      %v305 = vmul.f32 %v172, %v189
      %v306 = vmul.f32 %v173, %v190
      %v307 = vmul.f32 %v174, %v189
      %v308 = vmul.f32 %v175, %v190
      %v309 = vmul.f32 %v176, %v189
      %v310 = vmul.f32 %v177, %v190
      %v311 = vmul.f32 %v178, %v189
      %v312 = vmul.f32 %v179, %v190
      %v313 = vmul.f32 %v180, %v189
      %v314 = vmul.f32 %v181, %v190
      %v315 = vmul.f32 %v182, %v189
      %v316 = vmul.f32 %v183, %v190
      %v317 = vmul.f32 %v184, %v189
      %v318 = vmul.f32 %v185, %v190
      %v319 = vmul.f32 %v186, %v189
      %v320 = vmul.f32 %v187, %v190
      %v321 = vadd.f32 %v193, %v194
      %322 = vadd.xlane.f32.xlu0 %v321
      %v323 = vpop.xlane.xlu0 %322
      %v324 = vadd.f32 %v195, %v196
      %325 = vadd.xlane.f32.xlu0 %v324
      %v326 = vpop.xlane.xlu0 %325
      %v327 = vadd.f32 %v197, %v198
      %328 = vadd.xlane.f32.xlu0 %v327
      %v329 = vpop.xlane.xlu0 %328
      %v330 = vadd.f32 %v199, %v200
      %331 = vadd.xlane.f32.xlu0 %v330
      %v332 = vpop.xlane.xlu0 %331
      %v333 = vadd.f32 %v201, %v202
      %334 = vadd.xlane.f32.xlu0 %v333
      %v335 = vpop.xlane.xlu0 %334
      %v336 = vadd.f32 %v203, %v204
      %337 = vadd.xlane.f32.xlu0 %v336
      %v338 = vpop.xlane.xlu0 %337
      %v339 = vadd.f32 %v205, %v206
      %340 = vadd.xlane.f32.xlu0 %v339
      %v341 = vpop.xlane.xlu0 %340
      %v342 = vadd.f32 %v207, %v208
      %343 = vadd.xlane.f32.xlu0 %v342
      %v344 = vpop.xlane.xlu0 %343
      %v345 = vadd.f32 %v209, %v210
      %346 = vadd.xlane.f32.xlu0 %v345
      %v347 = vpop.xlane.xlu0 %346
      %v348 = vadd.f32 %v211, %v212
      %349 = vadd.xlane.f32.xlu0 %v348
      %v350 = vpop.xlane.xlu0 %349
      %v351 = vadd.f32 %v213, %v214
      %352 = vadd.xlane.f32.xlu0 %v351
      %v353 = vpop.xlane.xlu0 %352
      %v354 = vadd.f32 %v215, %v216
      %355 = vadd.xlane.f32.xlu0 %v354
      %v356 = vpop.xlane.xlu0 %355
      %v357 = vadd.f32 %v217, %v218
      %358 = vadd.xlane.f32.xlu0 %v357
      %v359 = vpop.xlane.xlu0 %358
      %v360 = vadd.f32 %v219, %v220
      %361 = vadd.xlane.f32.xlu0 %v360
      %v362 = vpop.xlane.xlu0 %361
      %v363 = vadd.f32 %v221, %v222
      %364 = vadd.xlane.f32.xlu0 %v363
      %v365 = vpop.xlane.xlu0 %364
      %v366 = vadd.f32 %v223, %v224
      %367 = vadd.xlane.f32.xlu0 %v366
      %v368 = vpop.xlane.xlu0 %367
      %v369 = vadd.f32 %v225, %v226
      %370 = vadd.xlane.f32.xlu0 %v369
      %v371 = vpop.xlane.xlu0 %370
      %v372 = vadd.f32 %v227, %v228
      %373 = vadd.xlane.f32.xlu0 %v372
      %v374 = vpop.xlane.xlu0 %373
      %v375 = vadd.f32 %v229, %v230
      %376 = vadd.xlane.f32.xlu0 %v375
      %v377 = vpop.xlane.xlu0 %376
      %v378 = vadd.f32 %v231, %v232
      %379 = vadd.xlane.f32.xlu0 %v378
      %v380 = vpop.xlane.xlu0 %379
      %v381 = vadd.f32 %v233, %v234
      %382 = vadd.xlane.f32.xlu0 %v381
      %v383 = vpop.xlane.xlu0 %382
      %v384 = vadd.f32 %v235, %v236
      %385 = vadd.xlane.f32.xlu0 %v384
      %v386 = vpop.xlane.xlu0 %385
      %v387 = vadd.f32 %v237, %v238
      %388 = vadd.xlane.f32.xlu0 %v387
      %v389 = vpop.xlane.xlu0 %388
      %v390 = vadd.f32 %v239, %v240
      %391 = vadd.xlane.f32.xlu0 %v390
      %v392 = vpop.xlane.xlu0 %391
      %v393 = vadd.f32 %v241, %v242
      %394 = vadd.xlane.f32.xlu0 %v393
      %v395 = vpop.xlane.xlu0 %394
      %v396 = vadd.f32 %v243, %v244
      %397 = vadd.xlane.f32.xlu0 %v396
      %v398 = vpop.xlane.xlu0 %397
      %v399 = vadd.f32 %v245, %v246
      %400 = vadd.xlane.f32.xlu0 %v399
      %v401 = vpop.xlane.xlu0 %400
      %v402 = vadd.f32 %v247, %v248
      %403 = vadd.xlane.f32.xlu0 %v402
      %v404 = vpop.xlane.xlu0 %403
      %v405 = vadd.f32 %v249, %v250
      %406 = vadd.xlane.f32.xlu0 %v405
      %v407 = vpop.xlane.xlu0 %406
      %v408 = vadd.f32 %v251, %v252
      %409 = vadd.xlane.f32.xlu0 %v408
      %v410 = vpop.xlane.xlu0 %409
      %v411 = vadd.f32 %v253, %v254
      %412 = vadd.xlane.f32.xlu0 %v411
      %v413 = vpop.xlane.xlu0 %412
      %v414 = vadd.f32 %v255, %v256
      %415 = vadd.xlane.f32.xlu0 %v414
      %v416 = vpop.xlane.xlu0 %415
      %v417 = vadd.f32 %v257, %v258
      %418 = vadd.xlane.f32.xlu0 %v417
      %v419 = vpop.xlane.xlu0 %418
      %v420 = vadd.f32 %v259, %v260
      %421 = vadd.xlane.f32.xlu0 %v420
      %v422 = vpop.xlane.xlu0 %421
      %v423 = vadd.f32 %v261, %v262
      %424 = vadd.xlane.f32.xlu0 %v423
      %v425 = vpop.xlane.xlu0 %424
      %v426 = vadd.f32 %v263, %v264
      %427 = vadd.xlane.f32.xlu0 %v426
      %v428 = vpop.xlane.xlu0 %427
      %v429 = vadd.f32 %v265, %v266
      %430 = vadd.xlane.f32.xlu0 %v429
      %v431 = vpop.xlane.xlu0 %430
      %v432 = vadd.f32 %v267, %v268
      %433 = vadd.xlane.f32.xlu0 %v432
      %v434 = vpop.xlane.xlu0 %433
      %v435 = vadd.f32 %v269, %v270
      %436 = vadd.xlane.f32.xlu0 %v435
      %v437 = vpop.xlane.xlu0 %436
      %v438 = vadd.f32 %v271, %v272
      %439 = vadd.xlane.f32.xlu0 %v438
      %v440 = vpop.xlane.xlu0 %439
      %v441 = vadd.f32 %v273, %v274
      %442 = vadd.xlane.f32.xlu0 %v441
      %v443 = vpop.xlane.xlu0 %442
      %v444 = vadd.f32 %v275, %v276
      %445 = vadd.xlane.f32.xlu0 %v444
      %v446 = vpop.xlane.xlu0 %445
      %v447 = vadd.f32 %v277, %v278
      %448 = vadd.xlane.f32.xlu0 %v447
      %v449 = vpop.xlane.xlu0 %448
      %v450 = vadd.f32 %v279, %v280
      %451 = vadd.xlane.f32.xlu0 %v450
      %v452 = vpop.xlane.xlu0 %451
      %v453 = vadd.f32 %v281, %v282
      %454 = vadd.xlane.f32.xlu0 %v453
      %v455 = vpop.xlane.xlu0 %454
      %v456 = vadd.f32 %v283, %v284
      %457 = vadd.xlane.f32.xlu0 %v456
      %v458 = vpop.xlane.xlu0 %457
      %v459 = vadd.f32 %v285, %v286
      %460 = vadd.xlane.f32.xlu0 %v459
      %v461 = vpop.xlane.xlu0 %460
      %v462 = vadd.f32 %v287, %v288
      %463 = vadd.xlane.f32.xlu0 %v462
      %v464 = vpop.xlane.xlu0 %463
      %v465 = vadd.f32 %v289, %v290
      %466 = vadd.xlane.f32.xlu0 %v465
      %v467 = vpop.xlane.xlu0 %466
      %v468 = vadd.f32 %v291, %v292
      %469 = vadd.xlane.f32.xlu0 %v468
      %v470 = vpop.xlane.xlu0 %469
      %v471 = vadd.f32 %v293, %v294
      %472 = vadd.xlane.f32.xlu0 %v471
      %v473 = vpop.xlane.xlu0 %472
      %v474 = vadd.f32 %v295, %v296
      %475 = vadd.xlane.f32.xlu0 %v474
      %v476 = vpop.xlane.xlu0 %475
      %v477 = vadd.f32 %v297, %v298
      %478 = vadd.xlane.f32.xlu0 %v477
      %v479 = vpop.xlane.xlu0 %478
      %v480 = vadd.f32 %v299, %v300
      %481 = vadd.xlane.f32.xlu0 %v480
      %v482 = vpop.xlane.xlu0 %481
      %v483 = vadd.f32 %v301, %v302
      %484 = vadd.xlane.f32.xlu0 %v483
      %v485 = vpop.xlane.xlu0 %484
      %v486 = vadd.f32 %v303, %v304
      %487 = vadd.xlane.f32.xlu0 %v486
      %v488 = vpop.xlane.xlu0 %487
      %v489 = vadd.f32 %v305, %v306
      %490 = vadd.xlane.f32.xlu0 %v489
      %v491 = vpop.xlane.xlu0 %490
      %v492 = vadd.f32 %v307, %v308
      %493 = vadd.xlane.f32.xlu0 %v492
      %v494 = vpop.xlane.xlu0 %493
      %v495 = vadd.f32 %v309, %v310
      %496 = vadd.xlane.f32.xlu0 %v495
      %v497 = vpop.xlane.xlu0 %496
      %v498 = vadd.f32 %v311, %v312
      %499 = vadd.xlane.f32.xlu0 %v498
      %v500 = vpop.xlane.xlu0 %499
      %v501 = vadd.f32 %v313, %v314
      %502 = vadd.xlane.f32.xlu0 %v501
      %v503 = vpop.xlane.xlu0 %502
      %v504 = vadd.f32 %v315, %v316
      %505 = vadd.xlane.f32.xlu0 %v504
      %v506 = vpop.xlane.xlu0 %505
      %v507 = vadd.f32 %v317, %v318
      %508 = vadd.xlane.f32.xlu0 %v507
      %v509 = vpop.xlane.xlu0 %508
      %v510 = vadd.f32 %v319, %v320
      %511 = vadd.xlane.f32.xlu0 %v510
      %v512 = vpop.xlane.xlu0 %511
      %v513 = vstv %s47
      %v514 = vadd.f32 %v323, %v513
      %v515 = vadd.f32 %v326, %v513
      %v516 = vadd.f32 %v329, %v513
      %v517 = vadd.f32 %v332, %v513
      %v518 = vadd.f32 %v335, %v513
      %v519 = vadd.f32 %v338, %v513
      %v520 = vadd.f32 %v341, %v513
      %v521 = vadd.f32 %v344, %v513
      %v522 = vadd.f32 %v347, %v513
      %v523 = vadd.f32 %v350, %v513
      %v524 = vadd.f32 %v353, %v513
      %v525 = vadd.f32 %v356, %v513
      %v526 = vadd.f32 %v359, %v513
      %v527 = vadd.f32 %v362, %v513
      %v528 = vadd.f32 %v365, %v513
      %v529 = vadd.f32 %v368, %v513
      %v530 = vadd.f32 %v371, %v513
      %v531 = vadd.f32 %v374, %v513
      %v532 = vadd.f32 %v377, %v513
      %v533 = vadd.f32 %v380, %v513
      %v534 = vadd.f32 %v383, %v513
      %v535 = vadd.f32 %v386, %v513
      %v536 = vadd.f32 %v389, %v513
      %v537 = vadd.f32 %v392, %v513
      %v538 = vadd.f32 %v395, %v513
      %v539 = vadd.f32 %v398, %v513
      %v540 = vadd.f32 %v401, %v513
      %v541 = vadd.f32 %v404, %v513
      %v542 = vadd.f32 %v407, %v513
      %v543 = vadd.f32 %v410, %v513
      %v544 = vadd.f32 %v413, %v513
      %v545 = vadd.f32 %v416, %v513
      %v546 = vadd.f32 %v419, %v513
      %v547 = vadd.f32 %v422, %v513
      %v548 = vadd.f32 %v425, %v513
      %v549 = vadd.f32 %v428, %v513
      %v550 = vadd.f32 %v431, %v513
      %v551 = vadd.f32 %v434, %v513
      %v552 = vadd.f32 %v437, %v513
      %v553 = vadd.f32 %v440, %v513
      %v554 = vadd.f32 %v443, %v513
      %v555 = vadd.f32 %v446, %v513
      %v556 = vadd.f32 %v449, %v513
      %v557 = vadd.f32 %v452, %v513
      %v558 = vadd.f32 %v455, %v513
      %v559 = vadd.f32 %v458, %v513
      %v560 = vadd.f32 %v461, %v513
      %v561 = vadd.f32 %v464, %v513
      %v562 = vadd.f32 %v467, %v513
      %v563 = vadd.f32 %v470, %v513
      %v564 = vadd.f32 %v473, %v513
      %v565 = vadd.f32 %v476, %v513
      %v566 = vadd.f32 %v479, %v513
      %v567 = vadd.f32 %v482, %v513
      %v568 = vadd.f32 %v485, %v513
      %v569 = vadd.f32 %v488, %v513
      %v570 = vadd.f32 %v491, %v513
      %v571 = vadd.f32 %v494, %v513
      %v572 = vadd.f32 %v497, %v513
      %v573 = vadd.f32 %v500, %v513
      %v574 = vadd.f32 %v503, %v513
      %v575 = vadd.f32 %v506, %v513
      %v576 = vadd.f32 %v509, %v513
      %v577 = vadd.f32 %v512, %v513
      %v642 = vperm.slane %v514, 0
      %v643 = vperm.slane %v514, 1
      %v644 = vperm.slane %v514, 2
      %v645 = vperm.slane %v514, 3
      %v646 = vperm.slane %v514, 4
      %v647 = vperm.slane %v514, 5
      %v648 = vperm.slane %v514, 6
      %v649 = vperm.slane %v514, 7
      %v650 = vperm.slane %v515, 0
      %v651 = vperm.slane %v515, 1
      %v652 = vperm.slane %v515, 2
      %v653 = vperm.slane %v515, 3
      %v654 = vperm.slane %v515, 4
      %v655 = vperm.slane %v515, 5
      %v656 = vperm.slane %v515, 6
      %v657 = vperm.slane %v515, 7
      %v658 = vperm.slane %v516, 0
      %v659 = vperm.slane %v516, 1
      %v660 = vperm.slane %v516, 2
      %v661 = vperm.slane %v516, 3
      %v662 = vperm.slane %v516, 4
      %v663 = vperm.slane %v516, 5
      %v664 = vperm.slane %v516, 6
      %v665 = vperm.slane %v516, 7
      %v666 = vperm.slane %v517, 0
      %v667 = vperm.slane %v517, 1
      %v668 = vperm.slane %v517, 2
      %v669 = vperm.slane %v517, 3
      %v670 = vperm.slane %v517, 4
      %v671 = vperm.slane %v517, 5
      %v672 = vperm.slane %v517, 6
      %v673 = vperm.slane %v517, 7
      %v674 = vperm.slane %v518, 0
      %v675 = vperm.slane %v518, 1
      %v676 = vperm.slane %v518, 2
      %v677 = vperm.slane %v518, 3
      %v678 = vperm.slane %v518, 4
      %v679 = vperm.slane %v518, 5
      %v680 = vperm.slane %v518, 6
      %v681 = vperm.slane %v518, 7
      %v682 = vperm.slane %v519, 0
      %v683 = vperm.slane %v519, 1
      %v684 = vperm.slane %v519, 2
      %v685 = vperm.slane %v519, 3
      %v686 = vperm.slane %v519, 4
      %v687 = vperm.slane %v519, 5
      %v688 = vperm.slane %v519, 6
      %v689 = vperm.slane %v519, 7
      %v690 = vperm.slane %v520, 0
      %v691 = vperm.slane %v520, 1
      %v692 = vperm.slane %v520, 2
      %v693 = vperm.slane %v520, 3
      %v694 = vperm.slane %v520, 4
      %v695 = vperm.slane %v520, 5
      %v696 = vperm.slane %v520, 6
      %v697 = vperm.slane %v520, 7
      %v698 = vperm.slane %v521, 0
      %v699 = vperm.slane %v521, 1
      %v700 = vperm.slane %v521, 2
      %v701 = vperm.slane %v521, 3
      %v702 = vperm.slane %v521, 4
      %v703 = vperm.slane %v521, 5
      %v704 = vperm.slane %v521, 6
      %v705 = vperm.slane %v521, 7
      %v706 = vperm.slane %v522, 0
      %v707 = vperm.slane %v522, 1
      %v708 = vperm.slane %v522, 2
      %v709 = vperm.slane %v522, 3
      %v710 = vperm.slane %v522, 4
      %v711 = vperm.slane %v522, 5
      %v712 = vperm.slane %v522, 6
      %v713 = vperm.slane %v522, 7
      %v714 = vperm.slane %v523, 0
      %v715 = vperm.slane %v523, 1
      %v716 = vperm.slane %v523, 2
      %v717 = vperm.slane %v523, 3
      %v718 = vperm.slane %v523, 4
      %v719 = vperm.slane %v523, 5
      %v720 = vperm.slane %v523, 6
      %v721 = vperm.slane %v523, 7
      %v722 = vperm.slane %v524, 0
      %v723 = vperm.slane %v524, 1
      %v724 = vperm.slane %v524, 2
      %v725 = vperm.slane %v524, 3
      %v726 = vperm.slane %v524, 4
      %v727 = vperm.slane %v524, 5
      %v728 = vperm.slane %v524, 6
      %v729 = vperm.slane %v524, 7
      %v730 = vperm.slane %v525, 0
      %v731 = vperm.slane %v525, 1
      %v732 = vperm.slane %v525, 2
      %v733 = vperm.slane %v525, 3
      %v734 = vperm.slane %v525, 4
      %v735 = vperm.slane %v525, 5
      %v736 = vperm.slane %v525, 6
      %v737 = vperm.slane %v525, 7
      %v738 = vperm.slane %v526, 0
      %v739 = vperm.slane %v526, 1
      %v740 = vperm.slane %v526, 2
      %v741 = vperm.slane %v526, 3
      %v742 = vperm.slane %v526, 4
      %v743 = vperm.slane %v526, 5
      %v744 = vperm.slane %v526, 6
      %v745 = vperm.slane %v526, 7
      %v746 = vperm.slane %v527, 0
      %v747 = vperm.slane %v527, 1
      %v748 = vperm.slane %v527, 2
      %v749 = vperm.slane %v527, 3
      %v750 = vperm.slane %v527, 4
      %v751 = vperm.slane %v527, 5
      %v752 = vperm.slane %v527, 6
      %v753 = vperm.slane %v527, 7
      %v754 = vperm.slane %v528, 0
      %v755 = vperm.slane %v528, 1
      %v756 = vperm.slane %v528, 2
      %v757 = vperm.slane %v528, 3
      %v758 = vperm.slane %v528, 4
      %v759 = vperm.slane %v528, 5
      %v760 = vperm.slane %v528, 6
      %v761 = vperm.slane %v528, 7
      %v762 = vperm.slane %v529, 0
      %v763 = vperm.slane %v529, 1
      %v764 = vperm.slane %v529, 2
      %v765 = vperm.slane %v529, 3
      %v766 = vperm.slane %v529, 4
      %v767 = vperm.slane %v529, 5
      %v768 = vperm.slane %v529, 6
      %v769 = vperm.slane %v529, 7
      %v770 = vperm.slane %v530, 0
      %v771 = vperm.slane %v530, 1
      %v772 = vperm.slane %v530, 2
      %v773 = vperm.slane %v530, 3
      %v774 = vperm.slane %v530, 4
      %v775 = vperm.slane %v530, 5
      %v776 = vperm.slane %v530, 6
      %v777 = vperm.slane %v530, 7
      %v778 = vperm.slane %v531, 0
      %v779 = vperm.slane %v531, 1
      %v780 = vperm.slane %v531, 2
      %v781 = vperm.slane %v531, 3
      %v782 = vperm.slane %v531, 4
      %v783 = vperm.slane %v531, 5
      %v784 = vperm.slane %v531, 6
      %v785 = vperm.slane %v531, 7
      %v786 = vperm.slane %v532, 0
      %v787 = vperm.slane %v532, 1
      %v788 = vperm.slane %v532, 2
      %v789 = vperm.slane %v532, 3
      %v790 = vperm.slane %v532, 4
      %v791 = vperm.slane %v532, 5
      %v792 = vperm.slane %v532, 6
      %v793 = vperm.slane %v532, 7
      %v794 = vperm.slane %v533, 0
      %v795 = vperm.slane %v533, 1
      %v796 = vperm.slane %v533, 2
      %v797 = vperm.slane %v533, 3
      %v798 = vperm.slane %v533, 4
      %v799 = vperm.slane %v533, 5
      %v800 = vperm.slane %v533, 6
      %v801 = vperm.slane %v533, 7
      %v802 = vperm.slane %v534, 0
      %v803 = vperm.slane %v534, 1
      %v804 = vperm.slane %v534, 2
      %v805 = vperm.slane %v534, 3
      %v806 = vperm.slane %v534, 4
      %v807 = vperm.slane %v534, 5
      %v808 = vperm.slane %v534, 6
      %v809 = vperm.slane %v534, 7
      %v810 = vperm.slane %v535, 0
      %v811 = vperm.slane %v535, 1
      %v812 = vperm.slane %v535, 2
      %v813 = vperm.slane %v535, 3
      %v814 = vperm.slane %v535, 4
      %v815 = vperm.slane %v535, 5
      %v816 = vperm.slane %v535, 6
      %v817 = vperm.slane %v535, 7
      %v818 = vperm.slane %v536, 0
      %v819 = vperm.slane %v536, 1
      %v820 = vperm.slane %v536, 2
      %v821 = vperm.slane %v536, 3
      %v822 = vperm.slane %v536, 4
      %v823 = vperm.slane %v536, 5
      %v824 = vperm.slane %v536, 6
      %v825 = vperm.slane %v536, 7
      %v826 = vperm.slane %v537, 0
      %v827 = vperm.slane %v537, 1
      %v828 = vperm.slane %v537, 2
      %v829 = vperm.slane %v537, 3
      %v830 = vperm.slane %v537, 4
      %v831 = vperm.slane %v537, 5
      %v832 = vperm.slane %v537, 6
      %v833 = vperm.slane %v537, 7
      %v834 = vperm.slane %v538, 0
      %v835 = vperm.slane %v538, 1
      %v836 = vperm.slane %v538, 2
      %v837 = vperm.slane %v538, 3
      %v838 = vperm.slane %v538, 4
      %v839 = vperm.slane %v538, 5
      %v840 = vperm.slane %v538, 6
      %v841 = vperm.slane %v538, 7
      %v842 = vperm.slane %v539, 0
      %v843 = vperm.slane %v539, 1
      %v844 = vperm.slane %v539, 2
      %v845 = vperm.slane %v539, 3
      %v846 = vperm.slane %v539, 4
      %v847 = vperm.slane %v539, 5
      %v848 = vperm.slane %v539, 6
      %v849 = vperm.slane %v539, 7
      %v850 = vperm.slane %v540, 0
      %v851 = vperm.slane %v540, 1
      %v852 = vperm.slane %v540, 2
      %v853 = vperm.slane %v540, 3
      %v854 = vperm.slane %v540, 4
      %v855 = vperm.slane %v540, 5
      %v856 = vperm.slane %v540, 6
      %v857 = vperm.slane %v540, 7
      %v858 = vperm.slane %v541, 0
      %v859 = vperm.slane %v541, 1
      %v860 = vperm.slane %v541, 2
      %v861 = vperm.slane %v541, 3
      %v862 = vperm.slane %v541, 4
      %v863 = vperm.slane %v541, 5
      %v864 = vperm.slane %v541, 6
      %v865 = vperm.slane %v541, 7
      %v866 = vperm.slane %v542, 0
      %v867 = vperm.slane %v542, 1
      %v868 = vperm.slane %v542, 2
      %v869 = vperm.slane %v542, 3
      %v870 = vperm.slane %v542, 4
      %v871 = vperm.slane %v542, 5
      %v872 = vperm.slane %v542, 6
      %v873 = vperm.slane %v542, 7
      %v874 = vperm.slane %v543, 0
      %v875 = vperm.slane %v543, 1
      %v876 = vperm.slane %v543, 2
      %v877 = vperm.slane %v543, 3
      %v878 = vperm.slane %v543, 4
      %v879 = vperm.slane %v543, 5
      %v880 = vperm.slane %v543, 6
      %v881 = vperm.slane %v543, 7
      %v882 = vperm.slane %v544, 0
      %v883 = vperm.slane %v544, 1
      %v884 = vperm.slane %v544, 2
      %v885 = vperm.slane %v544, 3
      %v886 = vperm.slane %v544, 4
      %v887 = vperm.slane %v544, 5
      %v888 = vperm.slane %v544, 6
      %v889 = vperm.slane %v544, 7
      %v890 = vperm.slane %v545, 0
      %v891 = vperm.slane %v545, 1
      %v892 = vperm.slane %v545, 2
      %v893 = vperm.slane %v545, 3
      %v894 = vperm.slane %v545, 4
      %v895 = vperm.slane %v545, 5
      %v896 = vperm.slane %v545, 6
      %v897 = vperm.slane %v545, 7
      %v898 = vperm.slane %v546, 0
      %v899 = vperm.slane %v546, 1
      %v900 = vperm.slane %v546, 2
      %v901 = vperm.slane %v546, 3
      %v902 = vperm.slane %v546, 4
      %v903 = vperm.slane %v546, 5
      %v904 = vperm.slane %v546, 6
      %v905 = vperm.slane %v546, 7
      %v906 = vperm.slane %v547, 0
      %v907 = vperm.slane %v547, 1
      %v908 = vperm.slane %v547, 2
      %v909 = vperm.slane %v547, 3
      %v910 = vperm.slane %v547, 4
      %v911 = vperm.slane %v547, 5
      %v912 = vperm.slane %v547, 6
      %v913 = vperm.slane %v547, 7
      %v914 = vperm.slane %v548, 0
      %v915 = vperm.slane %v548, 1
      %v916 = vperm.slane %v548, 2
      %v917 = vperm.slane %v548, 3
      %v918 = vperm.slane %v548, 4
      %v919 = vperm.slane %v548, 5
      %v920 = vperm.slane %v548, 6
      %v921 = vperm.slane %v548, 7
      %v922 = vperm.slane %v549, 0
      %v923 = vperm.slane %v549, 1
      %v924 = vperm.slane %v549, 2
      %v925 = vperm.slane %v549, 3
      %v926 = vperm.slane %v549, 4
      %v927 = vperm.slane %v549, 5
      %v928 = vperm.slane %v549, 6
      %v929 = vperm.slane %v549, 7
      %v930 = vperm.slane %v550, 0
      %v931 = vperm.slane %v550, 1
      %v932 = vperm.slane %v550, 2
      %v933 = vperm.slane %v550, 3
      %v934 = vperm.slane %v550, 4
      %v935 = vperm.slane %v550, 5
      %v936 = vperm.slane %v550, 6
      %v937 = vperm.slane %v550, 7
      %v938 = vperm.slane %v551, 0
      %v939 = vperm.slane %v551, 1
      %v940 = vperm.slane %v551, 2
      %v941 = vperm.slane %v551, 3
      %v942 = vperm.slane %v551, 4
      %v943 = vperm.slane %v551, 5
      %v944 = vperm.slane %v551, 6
      %v945 = vperm.slane %v551, 7
      %v946 = vperm.slane %v552, 0
      %v947 = vperm.slane %v552, 1
      %v948 = vperm.slane %v552, 2
      %v949 = vperm.slane %v552, 3
      %v950 = vperm.slane %v552, 4
      %v951 = vperm.slane %v552, 5
      %v952 = vperm.slane %v552, 6
      %v953 = vperm.slane %v552, 7
      %v954 = vperm.slane %v553, 0
      %v955 = vperm.slane %v553, 1
      %v956 = vperm.slane %v553, 2
      %v957 = vperm.slane %v553, 3
      %v958 = vperm.slane %v553, 4
      %v959 = vperm.slane %v553, 5
      %v960 = vperm.slane %v553, 6
      %v961 = vperm.slane %v553, 7
      %v962 = vperm.slane %v554, 0
      %v963 = vperm.slane %v554, 1
      %v964 = vperm.slane %v554, 2
      %v965 = vperm.slane %v554, 3
      %v966 = vperm.slane %v554, 4
      %v967 = vperm.slane %v554, 5
      %v968 = vperm.slane %v554, 6
      %v969 = vperm.slane %v554, 7
      %v970 = vperm.slane %v555, 0
      %v971 = vperm.slane %v555, 1
      %v972 = vperm.slane %v555, 2
      %v973 = vperm.slane %v555, 3
      %v974 = vperm.slane %v555, 4
      %v975 = vperm.slane %v555, 5
      %v976 = vperm.slane %v555, 6
      %v977 = vperm.slane %v555, 7
      %v978 = vperm.slane %v556, 0
      %v979 = vperm.slane %v556, 1
      %v980 = vperm.slane %v556, 2
      %v981 = vperm.slane %v556, 3
      %v982 = vperm.slane %v556, 4
      %v983 = vperm.slane %v556, 5
      %v984 = vperm.slane %v556, 6
      %v985 = vperm.slane %v556, 7
      %v986 = vperm.slane %v557, 0
      %v987 = vperm.slane %v557, 1
      %v988 = vperm.slane %v557, 2
      %v989 = vperm.slane %v557, 3
      %v990 = vperm.slane %v557, 4
      %v991 = vperm.slane %v557, 5
      %v992 = vperm.slane %v557, 6
      %v993 = vperm.slane %v557, 7
      %v994 = vperm.slane %v558, 0
      %v995 = vperm.slane %v558, 1
      %v996 = vperm.slane %v558, 2
      %v997 = vperm.slane %v558, 3
      %v998 = vperm.slane %v558, 4
      %v999 = vperm.slane %v558, 5
      %v1000 = vperm.slane %v558, 6
      %v1001 = vperm.slane %v558, 7
      %v1002 = vperm.slane %v559, 0
      %v1003 = vperm.slane %v559, 1
      %v1004 = vperm.slane %v559, 2
      %v1005 = vperm.slane %v559, 3
      %v1006 = vperm.slane %v559, 4
      %v1007 = vperm.slane %v559, 5
      %v1008 = vperm.slane %v559, 6
      %v1009 = vperm.slane %v559, 7
      %v1010 = vperm.slane %v560, 0
      %v1011 = vperm.slane %v560, 1
      %v1012 = vperm.slane %v560, 2
      %v1013 = vperm.slane %v560, 3
      %v1014 = vperm.slane %v560, 4
      %v1015 = vperm.slane %v560, 5
      %v1016 = vperm.slane %v560, 6
      %v1017 = vperm.slane %v560, 7
      %v1018 = vperm.slane %v561, 0
      %v1019 = vperm.slane %v561, 1
      %v1020 = vperm.slane %v561, 2
      %v1021 = vperm.slane %v561, 3
      %v1022 = vperm.slane %v561, 4
      %v1023 = vperm.slane %v561, 5
      %v1024 = vperm.slane %v561, 6
      %v1025 = vperm.slane %v561, 7
      %v1026 = vperm.slane %v562, 0
      %v1027 = vperm.slane %v562, 1
      %v1028 = vperm.slane %v562, 2
      %v1029 = vperm.slane %v562, 3
      %v1030 = vperm.slane %v562, 4
      %v1031 = vperm.slane %v562, 5
      %v1032 = vperm.slane %v562, 6
      %v1033 = vperm.slane %v562, 7
      %v1034 = vperm.slane %v563, 0
      %v1035 = vperm.slane %v563, 1
      %v1036 = vperm.slane %v563, 2
      %v1037 = vperm.slane %v563, 3
      %v1038 = vperm.slane %v563, 4
      %v1039 = vperm.slane %v563, 5
      %v1040 = vperm.slane %v563, 6
      %v1041 = vperm.slane %v563, 7
      %v1042 = vperm.slane %v564, 0
      %v1043 = vperm.slane %v564, 1
      %v1044 = vperm.slane %v564, 2
      %v1045 = vperm.slane %v564, 3
      %v1046 = vperm.slane %v564, 4
      %v1047 = vperm.slane %v564, 5
      %v1048 = vperm.slane %v564, 6
      %v1049 = vperm.slane %v564, 7
      %v1050 = vperm.slane %v565, 0
      %v1051 = vperm.slane %v565, 1
      %v1052 = vperm.slane %v565, 2
      %v1053 = vperm.slane %v565, 3
      %v1054 = vperm.slane %v565, 4
      %v1055 = vperm.slane %v565, 5
      %v1056 = vperm.slane %v565, 6
      %v1057 = vperm.slane %v565, 7
      %v1058 = vperm.slane %v566, 0
      %v1059 = vperm.slane %v566, 1
      %v1060 = vperm.slane %v566, 2
      %v1061 = vperm.slane %v566, 3
      %v1062 = vperm.slane %v566, 4
      %v1063 = vperm.slane %v566, 5
      %v1064 = vperm.slane %v566, 6
      %v1065 = vperm.slane %v566, 7
      %v1066 = vperm.slane %v567, 0
      %v1067 = vperm.slane %v567, 1
      %v1068 = vperm.slane %v567, 2
      %v1069 = vperm.slane %v567, 3
      %v1070 = vperm.slane %v567, 4
      %v1071 = vperm.slane %v567, 5
      %v1072 = vperm.slane %v567, 6
      %v1073 = vperm.slane %v567, 7
      %v1074 = vperm.slane %v568, 0
      %v1075 = vperm.slane %v568, 1
      %v1076 = vperm.slane %v568, 2
      %v1077 = vperm.slane %v568, 3
      %v1078 = vperm.slane %v568, 4
      %v1079 = vperm.slane %v568, 5
      %v1080 = vperm.slane %v568, 6
      %v1081 = vperm.slane %v568, 7
      %v1082 = vperm.slane %v569, 0
      %v1083 = vperm.slane %v569, 1
      %v1084 = vperm.slane %v569, 2
      %v1085 = vperm.slane %v569, 3
      %v1086 = vperm.slane %v569, 4
      %v1087 = vperm.slane %v569, 5
      %v1088 = vperm.slane %v569, 6
      %v1089 = vperm.slane %v569, 7
      %v1090 = vperm.slane %v570, 0
      %v1091 = vperm.slane %v570, 1
      %v1092 = vperm.slane %v570, 2
      %v1093 = vperm.slane %v570, 3
      %v1094 = vperm.slane %v570, 4
      %v1095 = vperm.slane %v570, 5
      %v1096 = vperm.slane %v570, 6
      %v1097 = vperm.slane %v570, 7
      %v1098 = vperm.slane %v571, 0
      %v1099 = vperm.slane %v571, 1
      %v1100 = vperm.slane %v571, 2
      %v1101 = vperm.slane %v571, 3
      %v1102 = vperm.slane %v571, 4
      %v1103 = vperm.slane %v571, 5
      %v1104 = vperm.slane %v571, 6
      %v1105 = vperm.slane %v571, 7
      %v1106 = vperm.slane %v572, 0
      %v1107 = vperm.slane %v572, 1
      %v1108 = vperm.slane %v572, 2
      %v1109 = vperm.slane %v572, 3
      %v1110 = vperm.slane %v572, 4
      %v1111 = vperm.slane %v572, 5
      %v1112 = vperm.slane %v572, 6
      %v1113 = vperm.slane %v572, 7
      %v1114 = vperm.slane %v573, 0
      %v1115 = vperm.slane %v573, 1
      %v1116 = vperm.slane %v573, 2
      %v1117 = vperm.slane %v573, 3
      %v1118 = vperm.slane %v573, 4
      %v1119 = vperm.slane %v573, 5
      %v1120 = vperm.slane %v573, 6
      %v1121 = vperm.slane %v573, 7
      %v1122 = vperm.slane %v574, 0
      %v1123 = vperm.slane %v574, 1
      %v1124 = vperm.slane %v574, 2
      %v1125 = vperm.slane %v574, 3
      %v1126 = vperm.slane %v574, 4
      %v1127 = vperm.slane %v574, 5
      %v1128 = vperm.slane %v574, 6
      %v1129 = vperm.slane %v574, 7
      %v1130 = vperm.slane %v575, 0
      %v1131 = vperm.slane %v575, 1
      %v1132 = vperm.slane %v575, 2
      %v1133 = vperm.slane %v575, 3
      %v1134 = vperm.slane %v575, 4
      %v1135 = vperm.slane %v575, 5
      %v1136 = vperm.slane %v575, 6
      %v1137 = vperm.slane %v575, 7
      %v1138 = vperm.slane %v576, 0
      %v1139 = vperm.slane %v576, 1
      %v1140 = vperm.slane %v576, 2
      %v1141 = vperm.slane %v576, 3
      %v1142 = vperm.slane %v576, 4
      %v1143 = vperm.slane %v576, 5
      %v1144 = vperm.slane %v576, 6
      %v1145 = vperm.slane %v576, 7
      %v1146 = vperm.slane %v577, 0
      %v1147 = vperm.slane %v577, 1
      %v1148 = vperm.slane %v577, 2
      %v1149 = vperm.slane %v577, 3
      %v1150 = vperm.slane %v577, 4
      %v1151 = vperm.slane %v577, 5
      %v1152 = vperm.slane %v577, 6
      %v1153 = vperm.slane %v577, 7
      %1154 = vst [vmem:[#allocation1] ss:$9 sm:$0xff] %v642
      %s1155 = scalar_lea.vmem [#allocation1], 1
      %1156 = vst [vmem:[%s1155] ss:$9 sm:$0xff] %v643
      %s1157 = scalar_lea.vmem [#allocation1], 2
      %1158 = vst [vmem:[%s1157] ss:$9 sm:$0xff] %v644
      %s1159 = scalar_lea.vmem [#allocation1], 3
      %1160 = vst [vmem:[%s1159] ss:$9 sm:$0xff] %v645
      %s1161 = scalar_lea.vmem [#allocation1], 4
      %1162 = vst [vmem:[%s1161] ss:$9 sm:$0xff] %v646
      %s1163 = scalar_lea.vmem [#allocation1], 5
      %1164 = vst [vmem:[%s1163] ss:$9 sm:$0xff] %v647
      %s1165 = scalar_lea.vmem [#allocation1], 6
      %1166 = vst [vmem:[%s1165] ss:$9 sm:$0xff] %v648
      %s1167 = scalar_lea.vmem [#allocation1], 7
      %1168 = vst [vmem:[%s1167] ss:$9 sm:$0xff] %v649
      %v1169 = vld [vmem:[#allocation1] sm:$0xff]
      %1170 = vst [vmem:[#allocation1] ss:$9 sm:$0xff] %v650
      %1171 = vst [vmem:[%s1155] ss:$9 sm:$0xff] %v651
      %1172 = vst [vmem:[%s1157] ss:$9 sm:$0xff] %v652
      %1173 = vst [vmem:[%s1159] ss:$9 sm:$0xff] %v653
      %1174 = vst [vmem:[%s1161] ss:$9 sm:$0xff] %v654
      %1175 = vst [vmem:[%s1163] ss:$9 sm:$0xff] %v655
      %1176 = vst [vmem:[%s1165] ss:$9 sm:$0xff] %v656
      %1177 = vst [vmem:[%s1167] ss:$9 sm:$0xff] %v657
      %v1178 = vld [vmem:[#allocation1] sm:$0xff]
      %1179 = vst [vmem:[#allocation1] ss:$9 sm:$0xff] %v658
      %1180 = vst [vmem:[%s1155] ss:$9 sm:$0xff] %v659
      %1181 = vst [vmem:[%s1157] ss:$9 sm:$0xff] %v660
      %1182 = vst [vmem:[%s1159] ss:$9 sm:$0xff] %v661
      %1183 = vst [vmem:[%s1161] ss:$9 sm:$0xff] %v662
      %1184 = vst [vmem:[%s1163] ss:$9 sm:$0xff] %v663
      %1185 = vst [vmem:[%s1165] ss:$9 sm:$0xff] %v664
      %1186 = vst [vmem:[%s1167] ss:$9 sm:$0xff] %v665
      %v1187 = vld [vmem:[#allocation1] sm:$0xff]
      %1188 = vst [vmem:[#allocation1] ss:$9 sm:$0xff] %v666
      %1189 = vst [vmem:[%s1155] ss:$9 sm:$0xff] %v667
      %1190 = vst [vmem:[%s1157] ss:$9 sm:$0xff] %v668
      %1191 = vst [vmem:[%s1159] ss:$9 sm:$0xff] %v669
      %1192 = vst [vmem:[%s1161] ss:$9 sm:$0xff] %v670
      %1193 = vst [vmem:[%s1163] ss:$9 sm:$0xff] %v671
      %1194 = vst [vmem:[%s1165] ss:$9 sm:$0xff] %v672
      %1195 = vst [vmem:[%s1167] ss:$9 sm:$0xff] %v673
      %v1196 = vld [vmem:[#allocation1] sm:$0xff]
      %1197 = vst [vmem:[#allocation1] ss:$9 sm:$0xff] %v674
      %1198 = vst [vmem:[%s1155] ss:$9 sm:$0xff] %v675
      %1199 = vst [vmem:[%s1157] ss:$9 sm:$0xff] %v676
      %1200 = vst [vmem:[%s1159] ss:$9 sm:$0xff] %v677
      %1201 = vst [vmem:[%s1161] ss:$9 sm:$0xff] %v678
      %1202 = vst [vmem:[%s1163] ss:$9 sm:$0xff] %v679
      %1203 = vst [vmem:[%s1165] ss:$9 sm:$0xff] %v680
      %1204 = vst [vmem:[%s1167] ss:$9 sm:$0xff] %v681
      %v1205 = vld [vmem:[#allocation1] sm:$0xff]
      %1206 = vst [vmem:[#allocation1] ss:$9 sm:$0xff] %v682
      %1207 = vst [vmem:[%s1155] ss:$9 sm:$0xff] %v683
      %1208 = vst [vmem:[%s1157] ss:$9 sm:$0xff] %v684
      %1209 = vst [vmem:[%s1159] ss:$9 sm:$0xff] %v685
      %1210 = vst [vmem:[%s1161] ss:$9 sm:$0xff] %v686
      %1211 = vst [vmem:[%s1163] ss:$9 sm:$0xff] %v687
      %1212 = vst [vmem:[%s1165] ss:$9 sm:$0xff] %v688
      %1213 = vst [vmem:[%s1167] ss:$9 sm:$0xff] %v689
      %v1214 = vld [vmem:[#allocation1] sm:$0xff]
      %1215 = vst [vmem:[#allocation1] ss:$9 sm:$0xff] %v690
      %1216 = vst [vmem:[%s1155] ss:$9 sm:$0xff] %v691
      %1217 = vst [vmem:[%s1157] ss:$9 sm:$0xff] %v692
      %1218 = vst [vmem:[%s1159] ss:$9 sm:$0xff] %v693
      %1219 = vst [vmem:[%s1161] ss:$9 sm:$0xff] %v694
      %1220 = vst [vmem:[%s1163] ss:$9 sm:$0xff] %v695
      %1221 = vst [vmem:[%s1165] ss:$9 sm:$0xff] %v696
      %1222 = vst [vmem:[%s1167] ss:$9 sm:$0xff] %v697
      %v1223 = vld [vmem:[#allocation1] sm:$0xff]
      %1224 = vst [vmem:[#allocation1] ss:$9 sm:$0xff] %v698
      %1225 = vst [vmem:[%s1155] ss:$9 sm:$0xff] %v699
      %1226 = vst [vmem:[%s1157] ss:$9 sm:$0xff] %v700
      %1227 = vst [vmem:[%s1159] ss:$9 sm:$0xff] %v701
      %1228 = vst [vmem:[%s1161] ss:$9 sm:$0xff] %v702
      %1229 = vst [vmem:[%s1163] ss:$9 sm:$0xff] %v703
      %1230 = vst [vmem:[%s1165] ss:$9 sm:$0xff] %v704
      %1231 = vst [vmem:[%s1167] ss:$9 sm:$0xff] %v705
      %v1232 = vld [vmem:[#allocation1] sm:$0xff]
      %1233 = vst [vmem:[#allocation1] ss:$9 sm:$0xff] %v706
      %1234 = vst [vmem:[%s1155] ss:$9 sm:$0xff] %v707
      %1235 = vst [vmem:[%s1157] ss:$9 sm:$0xff] %v708
      %1236 = vst [vmem:[%s1159] ss:$9 sm:$0xff] %v709
      %1237 = vst [vmem:[%s1161] ss:$9 sm:$0xff] %v710
      %1238 = vst [vmem:[%s1163] ss:$9 sm:$0xff] %v711
      %1239 = vst [vmem:[%s1165] ss:$9 sm:$0xff] %v712
      %1240 = vst [vmem:[%s1167] ss:$9 sm:$0xff] %v713
      %v1241 = vld [vmem:[#allocation1] sm:$0xff]
      %1242 = vst [vmem:[#allocation1] ss:$9 sm:$0xff] %v714
      %1243 = vst [vmem:[%s1155] ss:$9 sm:$0xff] %v715
      %1244 = vst [vmem:[%s1157] ss:$9 sm:$0xff] %v716
      %1245 = vst [vmem:[%s1159] ss:$9 sm:$0xff] %v717
      %1246 = vst [vmem:[%s1161] ss:$9 sm:$0xff] %v718
      %1247 = vst [vmem:[%s1163] ss:$9 sm:$0xff] %v719
      %1248 = vst [vmem:[%s1165] ss:$9 sm:$0xff] %v720
      %1249 = vst [vmem:[%s1167] ss:$9 sm:$0xff] %v721
      %v1250 = vld [vmem:[#allocation1] sm:$0xff]
      %1251 = vst [vmem:[#allocation1] ss:$9 sm:$0xff] %v722
      %1252 = vst [vmem:[%s1155] ss:$9 sm:$0xff] %v723
      %1253 = vst [vmem:[%s1157] ss:$9 sm:$0xff] %v724
      %1254 = vst [vmem:[%s1159] ss:$9 sm:$0xff] %v725
      %1255 = vst [vmem:[%s1161] ss:$9 sm:$0xff] %v726
      %1256 = vst [vmem:[%s1163] ss:$9 sm:$0xff] %v727
      %1257 = vst [vmem:[%s1165] ss:$9 sm:$0xff] %v728
      %1258 = vst [vmem:[%s1167] ss:$9 sm:$0xff] %v729
      %v1259 = vld [vmem:[#allocation1] sm:$0xff]
      %1260 = vst [vmem:[#allocation1] ss:$9 sm:$0xff] %v730
      %1261 = vst [vmem:[%s1155] ss:$9 sm:$0xff] %v731
      %1262 = vst [vmem:[%s1157] ss:$9 sm:$0xff] %v732
      %1263 = vst [vmem:[%s1159] ss:$9 sm:$0xff] %v733
      %1264 = vst [vmem:[%s1161] ss:$9 sm:$0xff] %v734
      %1265 = vst [vmem:[%s1163] ss:$9 sm:$0xff] %v735
      %1266 = vst [vmem:[%s1165] ss:$9 sm:$0xff] %v736
      %1267 = vst [vmem:[%s1167] ss:$9 sm:$0xff] %v737
      %v1268 = vld [vmem:[#allocation1] sm:$0xff]
      %1269 = vst [vmem:[#allocation1] ss:$9 sm:$0xff] %v738
      %1270 = vst [vmem:[%s1155] ss:$9 sm:$0xff] %v739
      %1271 = vst [vmem:[%s1157] ss:$9 sm:$0xff] %v740
      %1272 = vst [vmem:[%s1159] ss:$9 sm:$0xff] %v741
      %1273 = vst [vmem:[%s1161] ss:$9 sm:$0xff] %v742
      %1274 = vst [vmem:[%s1163] ss:$9 sm:$0xff] %v743
      %1275 = vst [vmem:[%s1165] ss:$9 sm:$0xff] %v744
      %1276 = vst [vmem:[%s1167] ss:$9 sm:$0xff] %v745
      %v1277 = vld [vmem:[#allocation1] sm:$0xff]
      %1278 = vst [vmem:[#allocation1] ss:$9 sm:$0xff] %v746
      %1279 = vst [vmem:[%s1155] ss:$9 sm:$0xff] %v747
      %1280 = vst [vmem:[%s1157] ss:$9 sm:$0xff] %v748
      %1281 = vst [vmem:[%s1159] ss:$9 sm:$0xff] %v749
      %1282 = vst [vmem:[%s1161] ss:$9 sm:$0xff] %v750
      %1283 = vst [vmem:[%s1163] ss:$9 sm:$0xff] %v751
      %1284 = vst [vmem:[%s1165] ss:$9 sm:$0xff] %v752
      %1285 = vst [vmem:[%s1167] ss:$9 sm:$0xff] %v753
      %v1286 = vld [vmem:[#allocation1] sm:$0xff]
      %1287 = vst [vmem:[#allocation1] ss:$9 sm:$0xff] %v754
      %1288 = vst [vmem:[%s1155] ss:$9 sm:$0xff] %v755
      %1289 = vst [vmem:[%s1157] ss:$9 sm:$0xff] %v756
      %1290 = vst [vmem:[%s1159] ss:$9 sm:$0xff] %v757
      %1291 = vst [vmem:[%s1161] ss:$9 sm:$0xff] %v758
      %1292 = vst [vmem:[%s1163] ss:$9 sm:$0xff] %v759
      %1293 = vst [vmem:[%s1165] ss:$9 sm:$0xff] %v760
      %1294 = vst [vmem:[%s1167] ss:$9 sm:$0xff] %v761
      %v1295 = vld [vmem:[#allocation1] sm:$0xff]
      %1296 = vst [vmem:[#allocation1] ss:$9 sm:$0xff] %v762
      %1297 = vst [vmem:[%s1155] ss:$9 sm:$0xff] %v763
      %1298 = vst [vmem:[%s1157] ss:$9 sm:$0xff] %v764
      %1299 = vst [vmem:[%s1159] ss:$9 sm:$0xff] %v765
      %1300 = vst [vmem:[%s1161] ss:$9 sm:$0xff] %v766
      %1301 = vst [vmem:[%s1163] ss:$9 sm:$0xff] %v767
      %1302 = vst [vmem:[%s1165] ss:$9 sm:$0xff] %v768
      %1303 = vst [vmem:[%s1167] ss:$9 sm:$0xff] %v769
      %v1304 = vld [vmem:[#allocation1] sm:$0xff]
      %1305 = vst [vmem:[#allocation1] ss:$9 sm:$0xff] %v770
      %1306 = vst [vmem:[%s1155] ss:$9 sm:$0xff] %v771
      %1307 = vst [vmem:[%s1157] ss:$9 sm:$0xff] %v772
      %1308 = vst [vmem:[%s1159] ss:$9 sm:$0xff] %v773
      %1309 = vst [vmem:[%s1161] ss:$9 sm:$0xff] %v774
      %1310 = vst [vmem:[%s1163] ss:$9 sm:$0xff] %v775
      %1311 = vst [vmem:[%s1165] ss:$9 sm:$0xff] %v776
      %1312 = vst [vmem:[%s1167] ss:$9 sm:$0xff] %v777
      %v1313 = vld [vmem:[#allocation1] sm:$0xff]
      %1314 = vst [vmem:[#allocation1] ss:$9 sm:$0xff] %v778
      %1315 = vst [vmem:[%s1155] ss:$9 sm:$0xff] %v779
      %1316 = vst [vmem:[%s1157] ss:$9 sm:$0xff] %v780
      %1317 = vst [vmem:[%s1159] ss:$9 sm:$0xff] %v781
      %1318 = vst [vmem:[%s1161] ss:$9 sm:$0xff] %v782
      %1319 = vst [vmem:[%s1163] ss:$9 sm:$0xff] %v783
      %1320 = vst [vmem:[%s1165] ss:$9 sm:$0xff] %v784
      %1321 = vst [vmem:[%s1167] ss:$9 sm:$0xff] %v785
      %v1322 = vld [vmem:[#allocation1] sm:$0xff]
      %1323 = vst [vmem:[#allocation1] ss:$9 sm:$0xff] %v786
      %1324 = vst [vmem:[%s1155] ss:$9 sm:$0xff] %v787
      %1325 = vst [vmem:[%s1157] ss:$9 sm:$0xff] %v788
      %1326 = vst [vmem:[%s1159] ss:$9 sm:$0xff] %v789
      %1327 = vst [vmem:[%s1161] ss:$9 sm:$0xff] %v790
      %1328 = vst [vmem:[%s1163] ss:$9 sm:$0xff] %v791
      %1329 = vst [vmem:[%s1165] ss:$9 sm:$0xff] %v792
      %1330 = vst [vmem:[%s1167] ss:$9 sm:$0xff] %v793
      %v1331 = vld [vmem:[#allocation1] sm:$0xff]
      %1332 = vst [vmem:[#allocation1] ss:$9 sm:$0xff] %v794
      %1333 = vst [vmem:[%s1155] ss:$9 sm:$0xff] %v795
      %1334 = vst [vmem:[%s1157] ss:$9 sm:$0xff] %v796
      %1335 = vst [vmem:[%s1159] ss:$9 sm:$0xff] %v797
      %1336 = vst [vmem:[%s1161] ss:$9 sm:$0xff] %v798
      %1337 = vst [vmem:[%s1163] ss:$9 sm:$0xff] %v799
      %1338 = vst [vmem:[%s1165] ss:$9 sm:$0xff] %v800
      %1339 = vst [vmem:[%s1167] ss:$9 sm:$0xff] %v801
      %v1340 = vld [vmem:[#allocation1] sm:$0xff]
      %1341 = vst [vmem:[#allocation1] ss:$9 sm:$0xff] %v802
      %1342 = vst [vmem:[%s1155] ss:$9 sm:$0xff] %v803
      %1343 = vst [vmem:[%s1157] ss:$9 sm:$0xff] %v804
      %1344 = vst [vmem:[%s1159] ss:$9 sm:$0xff] %v805
      %1345 = vst [vmem:[%s1161] ss:$9 sm:$0xff] %v806
      %1346 = vst [vmem:[%s1163] ss:$9 sm:$0xff] %v807
      %1347 = vst [vmem:[%s1165] ss:$9 sm:$0xff] %v808
      %1348 = vst [vmem:[%s1167] ss:$9 sm:$0xff] %v809
      %v1349 = vld [vmem:[#allocation1] sm:$0xff]
      %1350 = vst [vmem:[#allocation1] ss:$9 sm:$0xff] %v810
      %1351 = vst [vmem:[%s1155] ss:$9 sm:$0xff] %v811
      %1352 = vst [vmem:[%s1157] ss:$9 sm:$0xff] %v812
      %1353 = vst [vmem:[%s1159] ss:$9 sm:$0xff] %v813
      %1354 = vst [vmem:[%s1161] ss:$9 sm:$0xff] %v814
      %1355 = vst [vmem:[%s1163] ss:$9 sm:$0xff] %v815
      %1356 = vst [vmem:[%s1165] ss:$9 sm:$0xff] %v816
      %1357 = vst [vmem:[%s1167] ss:$9 sm:$0xff] %v817
      %v1358 = vld [vmem:[#allocation1] sm:$0xff]
      %1359 = vst [vmem:[#allocation1] ss:$9 sm:$0xff] %v818
      %1360 = vst [vmem:[%s1155] ss:$9 sm:$0xff] %v819
      %1361 = vst [vmem:[%s1157] ss:$9 sm:$0xff] %v820
      %1362 = vst [vmem:[%s1159] ss:$9 sm:$0xff] %v821
      %1363 = vst [vmem:[%s1161] ss:$9 sm:$0xff] %v822
      %1364 = vst [vmem:[%s1163] ss:$9 sm:$0xff] %v823
      %1365 = vst [vmem:[%s1165] ss:$9 sm:$0xff] %v824
      %1366 = vst [vmem:[%s1167] ss:$9 sm:$0xff] %v825
      %v1367 = vld [vmem:[#allocation1] sm:$0xff]
      %1368 = vst [vmem:[#allocation1] ss:$9 sm:$0xff] %v826
      %1369 = vst [vmem:[%s1155] ss:$9 sm:$0xff] %v827
      %1370 = vst [vmem:[%s1157] ss:$9 sm:$0xff] %v828
      %1371 = vst [vmem:[%s1159] ss:$9 sm:$0xff] %v829
      %1372 = vst [vmem:[%s1161] ss:$9 sm:$0xff] %v830
      %1373 = vst [vmem:[%s1163] ss:$9 sm:$0xff] %v831
      %1374 = vst [vmem:[%s1165] ss:$9 sm:$0xff] %v832
      %1375 = vst [vmem:[%s1167] ss:$9 sm:$0xff] %v833
      %v1376 = vld [vmem:[#allocation1] sm:$0xff]
      %1377 = vst [vmem:[#allocation1] ss:$9 sm:$0xff] %v834
      %1378 = vst [vmem:[%s1155] ss:$9 sm:$0xff] %v835
      %1379 = vst [vmem:[%s1157] ss:$9 sm:$0xff] %v836
      %1380 = vst [vmem:[%s1159] ss:$9 sm:$0xff] %v837
      %1381 = vst [vmem:[%s1161] ss:$9 sm:$0xff] %v838
      %1382 = vst [vmem:[%s1163] ss:$9 sm:$0xff] %v839
      %1383 = vst [vmem:[%s1165] ss:$9 sm:$0xff] %v840
      %1384 = vst [vmem:[%s1167] ss:$9 sm:$0xff] %v841
      %v1385 = vld [vmem:[#allocation1] sm:$0xff]
      %1386 = vst [vmem:[#allocation1] ss:$9 sm:$0xff] %v842
      %1387 = vst [vmem:[%s1155] ss:$9 sm:$0xff] %v843
      %1388 = vst [vmem:[%s1157] ss:$9 sm:$0xff] %v844
      %1389 = vst [vmem:[%s1159] ss:$9 sm:$0xff] %v845
      %1390 = vst [vmem:[%s1161] ss:$9 sm:$0xff] %v846
      %1391 = vst [vmem:[%s1163] ss:$9 sm:$0xff] %v847
      %1392 = vst [vmem:[%s1165] ss:$9 sm:$0xff] %v848
      %1393 = vst [vmem:[%s1167] ss:$9 sm:$0xff] %v849
      %v1394 = vld [vmem:[#allocation1] sm:$0xff]
      %1395 = vst [vmem:[#allocation1] ss:$9 sm:$0xff] %v850
      %1396 = vst [vmem:[%s1155] ss:$9 sm:$0xff] %v851
      %1397 = vst [vmem:[%s1157] ss:$9 sm:$0xff] %v852
      %1398 = vst [vmem:[%s1159] ss:$9 sm:$0xff] %v853
      %1399 = vst [vmem:[%s1161] ss:$9 sm:$0xff] %v854
      %1400 = vst [vmem:[%s1163] ss:$9 sm:$0xff] %v855
      %1401 = vst [vmem:[%s1165] ss:$9 sm:$0xff] %v856
      %1402 = vst [vmem:[%s1167] ss:$9 sm:$0xff] %v857
      %v1403 = vld [vmem:[#allocation1] sm:$0xff]
      %1404 = vst [vmem:[#allocation1] ss:$9 sm:$0xff] %v858
      %1405 = vst [vmem:[%s1155] ss:$9 sm:$0xff] %v859
      %1406 = vst [vmem:[%s1157] ss:$9 sm:$0xff] %v860
      %1407 = vst [vmem:[%s1159] ss:$9 sm:$0xff] %v861
      %1408 = vst [vmem:[%s1161] ss:$9 sm:$0xff] %v862
      %1409 = vst [vmem:[%s1163] ss:$9 sm:$0xff] %v863
      %1410 = vst [vmem:[%s1165] ss:$9 sm:$0xff] %v864
      %1411 = vst [vmem:[%s1167] ss:$9 sm:$0xff] %v865
      %v1412 = vld [vmem:[#allocation1] sm:$0xff]
      %1413 = vst [vmem:[#allocation1] ss:$9 sm:$0xff] %v866
      %1414 = vst [vmem:[%s1155] ss:$9 sm:$0xff] %v867
      %1415 = vst [vmem:[%s1157] ss:$9 sm:$0xff] %v868
      %1416 = vst [vmem:[%s1159] ss:$9 sm:$0xff] %v869
      %1417 = vst [vmem:[%s1161] ss:$9 sm:$0xff] %v870
      %1418 = vst [vmem:[%s1163] ss:$9 sm:$0xff] %v871
      %1419 = vst [vmem:[%s1165] ss:$9 sm:$0xff] %v872
      %1420 = vst [vmem:[%s1167] ss:$9 sm:$0xff] %v873
      %v1421 = vld [vmem:[#allocation1] sm:$0xff]
      %1422 = vst [vmem:[#allocation1] ss:$9 sm:$0xff] %v874
      %1423 = vst [vmem:[%s1155] ss:$9 sm:$0xff] %v875
      %1424 = vst [vmem:[%s1157] ss:$9 sm:$0xff] %v876
      %1425 = vst [vmem:[%s1159] ss:$9 sm:$0xff] %v877
      %1426 = vst [vmem:[%s1161] ss:$9 sm:$0xff] %v878
      %1427 = vst [vmem:[%s1163] ss:$9 sm:$0xff] %v879
      %1428 = vst [vmem:[%s1165] ss:$9 sm:$0xff] %v880
      %1429 = vst [vmem:[%s1167] ss:$9 sm:$0xff] %v881
      %v1430 = vld [vmem:[#allocation1] sm:$0xff]
      %1431 = vst [vmem:[#allocation1] ss:$9 sm:$0xff] %v882
      %1432 = vst [vmem:[%s1155] ss:$9 sm:$0xff] %v883
      %1433 = vst [vmem:[%s1157] ss:$9 sm:$0xff] %v884
      %1434 = vst [vmem:[%s1159] ss:$9 sm:$0xff] %v885
      %1435 = vst [vmem:[%s1161] ss:$9 sm:$0xff] %v886
      %1436 = vst [vmem:[%s1163] ss:$9 sm:$0xff] %v887
      %1437 = vst [vmem:[%s1165] ss:$9 sm:$0xff] %v888
      %1438 = vst [vmem:[%s1167] ss:$9 sm:$0xff] %v889
      %v1439 = vld [vmem:[#allocation1] sm:$0xff]
      %1440 = vst [vmem:[#allocation1] ss:$9 sm:$0xff] %v890
      %1441 = vst [vmem:[%s1155] ss:$9 sm:$0xff] %v891
      %1442 = vst [vmem:[%s1157] ss:$9 sm:$0xff] %v892
      %1443 = vst [vmem:[%s1159] ss:$9 sm:$0xff] %v893
      %1444 = vst [vmem:[%s1161] ss:$9 sm:$0xff] %v894
      %1445 = vst [vmem:[%s1163] ss:$9 sm:$0xff] %v895
      %1446 = vst [vmem:[%s1165] ss:$9 sm:$0xff] %v896
      %1447 = vst [vmem:[%s1167] ss:$9 sm:$0xff] %v897
      %v1448 = vld [vmem:[#allocation1] sm:$0xff]
      %1449 = vst [vmem:[#allocation1] ss:$9 sm:$0xff] %v898
      %1450 = vst [vmem:[%s1155] ss:$9 sm:$0xff] %v899
      %1451 = vst [vmem:[%s1157] ss:$9 sm:$0xff] %v900
      %1452 = vst [vmem:[%s1159] ss:$9 sm:$0xff] %v901
      %1453 = vst [vmem:[%s1161] ss:$9 sm:$0xff] %v902
      %1454 = vst [vmem:[%s1163] ss:$9 sm:$0xff] %v903
      %1455 = vst [vmem:[%s1165] ss:$9 sm:$0xff] %v904
      %1456 = vst [vmem:[%s1167] ss:$9 sm:$0xff] %v905
      %v1457 = vld [vmem:[#allocation1] sm:$0xff]
      %1458 = vst [vmem:[#allocation1] ss:$9 sm:$0xff] %v906
      %1459 = vst [vmem:[%s1155] ss:$9 sm:$0xff] %v907
      %1460 = vst [vmem:[%s1157] ss:$9 sm:$0xff] %v908
      %1461 = vst [vmem:[%s1159] ss:$9 sm:$0xff] %v909
      %1462 = vst [vmem:[%s1161] ss:$9 sm:$0xff] %v910
      %1463 = vst [vmem:[%s1163] ss:$9 sm:$0xff] %v911
      %1464 = vst [vmem:[%s1165] ss:$9 sm:$0xff] %v912
      %1465 = vst [vmem:[%s1167] ss:$9 sm:$0xff] %v913
      %v1466 = vld [vmem:[#allocation1] sm:$0xff]
      %1467 = vst [vmem:[#allocation1] ss:$9 sm:$0xff] %v914
      %1468 = vst [vmem:[%s1155] ss:$9 sm:$0xff] %v915
      %1469 = vst [vmem:[%s1157] ss:$9 sm:$0xff] %v916
      %1470 = vst [vmem:[%s1159] ss:$9 sm:$0xff] %v917
      %1471 = vst [vmem:[%s1161] ss:$9 sm:$0xff] %v918
      %1472 = vst [vmem:[%s1163] ss:$9 sm:$0xff] %v919
      %1473 = vst [vmem:[%s1165] ss:$9 sm:$0xff] %v920
      %1474 = vst [vmem:[%s1167] ss:$9 sm:$0xff] %v921
      %v1475 = vld [vmem:[#allocation1] sm:$0xff]
      %1476 = vst [vmem:[#allocation1] ss:$9 sm:$0xff] %v922
      %1477 = vst [vmem:[%s1155] ss:$9 sm:$0xff] %v923
      %1478 = vst [vmem:[%s1157] ss:$9 sm:$0xff] %v924
      %1479 = vst [vmem:[%s1159] ss:$9 sm:$0xff] %v925
      %1480 = vst [vmem:[%s1161] ss:$9 sm:$0xff] %v926
      %1481 = vst [vmem:[%s1163] ss:$9 sm:$0xff] %v927
      %1482 = vst [vmem:[%s1165] ss:$9 sm:$0xff] %v928
      %1483 = vst [vmem:[%s1167] ss:$9 sm:$0xff] %v929
      %v1484 = vld [vmem:[#allocation1] sm:$0xff]
      %1485 = vst [vmem:[#allocation1] ss:$9 sm:$0xff] %v930
      %1486 = vst [vmem:[%s1155] ss:$9 sm:$0xff] %v931
      %1487 = vst [vmem:[%s1157] ss:$9 sm:$0xff] %v932
      %1488 = vst [vmem:[%s1159] ss:$9 sm:$0xff] %v933
      %1489 = vst [vmem:[%s1161] ss:$9 sm:$0xff] %v934
      %1490 = vst [vmem:[%s1163] ss:$9 sm:$0xff] %v935
      %1491 = vst [vmem:[%s1165] ss:$9 sm:$0xff] %v936
      %1492 = vst [vmem:[%s1167] ss:$9 sm:$0xff] %v937
      %v1493 = vld [vmem:[#allocation1] sm:$0xff]
      %1494 = vst [vmem:[#allocation1] ss:$9 sm:$0xff] %v938
      %1495 = vst [vmem:[%s1155] ss:$9 sm:$0xff] %v939
      %1496 = vst [vmem:[%s1157] ss:$9 sm:$0xff] %v940
      %1497 = vst [vmem:[%s1159] ss:$9 sm:$0xff] %v941
      %1498 = vst [vmem:[%s1161] ss:$9 sm:$0xff] %v942
      %1499 = vst [vmem:[%s1163] ss:$9 sm:$0xff] %v943
      %1500 = vst [vmem:[%s1165] ss:$9 sm:$0xff] %v944
      %1501 = vst [vmem:[%s1167] ss:$9 sm:$0xff] %v945
      %v1502 = vld [vmem:[#allocation1] sm:$0xff]
      %1503 = vst [vmem:[#allocation1] ss:$9 sm:$0xff] %v946
      %1504 = vst [vmem:[%s1155] ss:$9 sm:$0xff] %v947
      %1505 = vst [vmem:[%s1157] ss:$9 sm:$0xff] %v948
      %1506 = vst [vmem:[%s1159] ss:$9 sm:$0xff] %v949
      %1507 = vst [vmem:[%s1161] ss:$9 sm:$0xff] %v950
      %1508 = vst [vmem:[%s1163] ss:$9 sm:$0xff] %v951
      %1509 = vst [vmem:[%s1165] ss:$9 sm:$0xff] %v952
      %1510 = vst [vmem:[%s1167] ss:$9 sm:$0xff] %v953
      %v1511 = vld [vmem:[#allocation1] sm:$0xff]
      %1512 = vst [vmem:[#allocation1] ss:$9 sm:$0xff] %v954
      %1513 = vst [vmem:[%s1155] ss:$9 sm:$0xff] %v955
      %1514 = vst [vmem:[%s1157] ss:$9 sm:$0xff] %v956
      %1515 = vst [vmem:[%s1159] ss:$9 sm:$0xff] %v957
      %1516 = vst [vmem:[%s1161] ss:$9 sm:$0xff] %v958
      %1517 = vst [vmem:[%s1163] ss:$9 sm:$0xff] %v959
      %1518 = vst [vmem:[%s1165] ss:$9 sm:$0xff] %v960
      %1519 = vst [vmem:[%s1167] ss:$9 sm:$0xff] %v961
      %v1520 = vld [vmem:[#allocation1] sm:$0xff]
      %1521 = vst [vmem:[#allocation1] ss:$9 sm:$0xff] %v962
      %1522 = vst [vmem:[%s1155] ss:$9 sm:$0xff] %v963
      %1523 = vst [vmem:[%s1157] ss:$9 sm:$0xff] %v964
      %1524 = vst [vmem:[%s1159] ss:$9 sm:$0xff] %v965
      %1525 = vst [vmem:[%s1161] ss:$9 sm:$0xff] %v966
      %1526 = vst [vmem:[%s1163] ss:$9 sm:$0xff] %v967
      %1527 = vst [vmem:[%s1165] ss:$9 sm:$0xff] %v968
      %1528 = vst [vmem:[%s1167] ss:$9 sm:$0xff] %v969
      %v1529 = vld [vmem:[#allocation1] sm:$0xff]
      %1530 = vst [vmem:[#allocation1] ss:$9 sm:$0xff] %v970
      %1531 = vst [vmem:[%s1155] ss:$9 sm:$0xff] %v971
      %1532 = vst [vmem:[%s1157] ss:$9 sm:$0xff] %v972
      %1533 = vst [vmem:[%s1159] ss:$9 sm:$0xff] %v973
      %1534 = vst [vmem:[%s1161] ss:$9 sm:$0xff] %v974
      %1535 = vst [vmem:[%s1163] ss:$9 sm:$0xff] %v975
      %1536 = vst [vmem:[%s1165] ss:$9 sm:$0xff] %v976
      %1537 = vst [vmem:[%s1167] ss:$9 sm:$0xff] %v977
      %v1538 = vld [vmem:[#allocation1] sm:$0xff]
      %1539 = vst [vmem:[#allocation1] ss:$9 sm:$0xff] %v978
      %1540 = vst [vmem:[%s1155] ss:$9 sm:$0xff] %v979
      %1541 = vst [vmem:[%s1157] ss:$9 sm:$0xff] %v980
      %1542 = vst [vmem:[%s1159] ss:$9 sm:$0xff] %v981
      %1543 = vst [vmem:[%s1161] ss:$9 sm:$0xff] %v982
      %1544 = vst [vmem:[%s1163] ss:$9 sm:$0xff] %v983
      %1545 = vst [vmem:[%s1165] ss:$9 sm:$0xff] %v984
      %1546 = vst [vmem:[%s1167] ss:$9 sm:$0xff] %v985
      %v1547 = vld [vmem:[#allocation1] sm:$0xff]
      %1548 = vst [vmem:[#allocation1] ss:$9 sm:$0xff] %v986
      %1549 = vst [vmem:[%s1155] ss:$9 sm:$0xff] %v987
      %1550 = vst [vmem:[%s1157] ss:$9 sm:$0xff] %v988
      %1551 = vst [vmem:[%s1159] ss:$9 sm:$0xff] %v989
      %1552 = vst [vmem:[%s1161] ss:$9 sm:$0xff] %v990
      %1553 = vst [vmem:[%s1163] ss:$9 sm:$0xff] %v991
      %1554 = vst [vmem:[%s1165] ss:$9 sm:$0xff] %v992
      %1555 = vst [vmem:[%s1167] ss:$9 sm:$0xff] %v993
      %v1556 = vld [vmem:[#allocation1] sm:$0xff]
      %1557 = vst [vmem:[#allocation1] ss:$9 sm:$0xff] %v994
      %1558 = vst [vmem:[%s1155] ss:$9 sm:$0xff] %v995
      %1559 = vst [vmem:[%s1157] ss:$9 sm:$0xff] %v996
      %1560 = vst [vmem:[%s1159] ss:$9 sm:$0xff] %v997
      %1561 = vst [vmem:[%s1161] ss:$9 sm:$0xff] %v998
      %1562 = vst [vmem:[%s1163] ss:$9 sm:$0xff] %v999
      %1563 = vst [vmem:[%s1165] ss:$9 sm:$0xff] %v1000
      %1564 = vst [vmem:[%s1167] ss:$9 sm:$0xff] %v1001
      %v1565 = vld [vmem:[#allocation1] sm:$0xff]
      %1566 = vst [vmem:[#allocation1] ss:$9 sm:$0xff] %v1002
      %1567 = vst [vmem:[%s1155] ss:$9 sm:$0xff] %v1003
      %1568 = vst [vmem:[%s1157] ss:$9 sm:$0xff] %v1004
      %1569 = vst [vmem:[%s1159] ss:$9 sm:$0xff] %v1005
      %1570 = vst [vmem:[%s1161] ss:$9 sm:$0xff] %v1006
      %1571 = vst [vmem:[%s1163] ss:$9 sm:$0xff] %v1007
      %1572 = vst [vmem:[%s1165] ss:$9 sm:$0xff] %v1008
      %1573 = vst [vmem:[%s1167] ss:$9 sm:$0xff] %v1009
      %v1574 = vld [vmem:[#allocation1] sm:$0xff]
      %1575 = vst [vmem:[#allocation1] ss:$9 sm:$0xff] %v1010
      %1576 = vst [vmem:[%s1155] ss:$9 sm:$0xff] %v1011
      %1577 = vst [vmem:[%s1157] ss:$9 sm:$0xff] %v1012
      %1578 = vst [vmem:[%s1159] ss:$9 sm:$0xff] %v1013
      %1579 = vst [vmem:[%s1161] ss:$9 sm:$0xff] %v1014
      %1580 = vst [vmem:[%s1163] ss:$9 sm:$0xff] %v1015
      %1581 = vst [vmem:[%s1165] ss:$9 sm:$0xff] %v1016
      %1582 = vst [vmem:[%s1167] ss:$9 sm:$0xff] %v1017
      %v1583 = vld [vmem:[#allocation1] sm:$0xff]
      %1584 = vst [vmem:[#allocation1] ss:$9 sm:$0xff] %v1018
      %1585 = vst [vmem:[%s1155] ss:$9 sm:$0xff] %v1019
      %1586 = vst [vmem:[%s1157] ss:$9 sm:$0xff] %v1020
      %1587 = vst [vmem:[%s1159] ss:$9 sm:$0xff] %v1021
      %1588 = vst [vmem:[%s1161] ss:$9 sm:$0xff] %v1022
      %1589 = vst [vmem:[%s1163] ss:$9 sm:$0xff] %v1023
      %1590 = vst [vmem:[%s1165] ss:$9 sm:$0xff] %v1024
      %1591 = vst [vmem:[%s1167] ss:$9 sm:$0xff] %v1025
      %v1592 = vld [vmem:[#allocation1] sm:$0xff]
      %1593 = vst [vmem:[#allocation1] ss:$9 sm:$0xff] %v1026
      %1594 = vst [vmem:[%s1155] ss:$9 sm:$0xff] %v1027
      %1595 = vst [vmem:[%s1157] ss:$9 sm:$0xff] %v1028
      %1596 = vst [vmem:[%s1159] ss:$9 sm:$0xff] %v1029
      %1597 = vst [vmem:[%s1161] ss:$9 sm:$0xff] %v1030
      %1598 = vst [vmem:[%s1163] ss:$9 sm:$0xff] %v1031
      %1599 = vst [vmem:[%s1165] ss:$9 sm:$0xff] %v1032
      %1600 = vst [vmem:[%s1167] ss:$9 sm:$0xff] %v1033
      %v1601 = vld [vmem:[#allocation1] sm:$0xff]
      %1602 = vst [vmem:[#allocation1] ss:$9 sm:$0xff] %v1034
      %1603 = vst [vmem:[%s1155] ss:$9 sm:$0xff] %v1035
      %1604 = vst [vmem:[%s1157] ss:$9 sm:$0xff] %v1036
      %1605 = vst [vmem:[%s1159] ss:$9 sm:$0xff] %v1037
      %1606 = vst [vmem:[%s1161] ss:$9 sm:$0xff] %v1038
      %1607 = vst [vmem:[%s1163] ss:$9 sm:$0xff] %v1039
      %1608 = vst [vmem:[%s1165] ss:$9 sm:$0xff] %v1040
      %1609 = vst [vmem:[%s1167] ss:$9 sm:$0xff] %v1041
      %v1610 = vld [vmem:[#allocation1] sm:$0xff]
      %1611 = vst [vmem:[#allocation1] ss:$9 sm:$0xff] %v1042
      %1612 = vst [vmem:[%s1155] ss:$9 sm:$0xff] %v1043
      %1613 = vst [vmem:[%s1157] ss:$9 sm:$0xff] %v1044
      %1614 = vst [vmem:[%s1159] ss:$9 sm:$0xff] %v1045
      %1615 = vst [vmem:[%s1161] ss:$9 sm:$0xff] %v1046
      %1616 = vst [vmem:[%s1163] ss:$9 sm:$0xff] %v1047
      %1617 = vst [vmem:[%s1165] ss:$9 sm:$0xff] %v1048
      %1618 = vst [vmem:[%s1167] ss:$9 sm:$0xff] %v1049
      %v1619 = vld [vmem:[#allocation1] sm:$0xff]
      %1620 = vst [vmem:[#allocation1] ss:$9 sm:$0xff] %v1050
      %1621 = vst [vmem:[%s1155] ss:$9 sm:$0xff] %v1051
      %1622 = vst [vmem:[%s1157] ss:$9 sm:$0xff] %v1052
      %1623 = vst [vmem:[%s1159] ss:$9 sm:$0xff] %v1053
      %1624 = vst [vmem:[%s1161] ss:$9 sm:$0xff] %v1054
      %1625 = vst [vmem:[%s1163] ss:$9 sm:$0xff] %v1055
      %1626 = vst [vmem:[%s1165] ss:$9 sm:$0xff] %v1056
      %1627 = vst [vmem:[%s1167] ss:$9 sm:$0xff] %v1057
      %v1628 = vld [vmem:[#allocation1] sm:$0xff]
      %1629 = vst [vmem:[#allocation1] ss:$9 sm:$0xff] %v1058
      %1630 = vst [vmem:[%s1155] ss:$9 sm:$0xff] %v1059
      %1631 = vst [vmem:[%s1157] ss:$9 sm:$0xff] %v1060
      %1632 = vst [vmem:[%s1159] ss:$9 sm:$0xff] %v1061
      %1633 = vst [vmem:[%s1161] ss:$9 sm:$0xff] %v1062
      %1634 = vst [vmem:[%s1163] ss:$9 sm:$0xff] %v1063
      %1635 = vst [vmem:[%s1165] ss:$9 sm:$0xff] %v1064
      %1636 = vst [vmem:[%s1167] ss:$9 sm:$0xff] %v1065
      %v1637 = vld [vmem:[#allocation1] sm:$0xff]
      %1638 = vst [vmem:[#allocation1] ss:$9 sm:$0xff] %v1066
      %1639 = vst [vmem:[%s1155] ss:$9 sm:$0xff] %v1067
      %1640 = vst [vmem:[%s1157] ss:$9 sm:$0xff] %v1068
      %1641 = vst [vmem:[%s1159] ss:$9 sm:$0xff] %v1069
      %1642 = vst [vmem:[%s1161] ss:$9 sm:$0xff] %v1070
      %1643 = vst [vmem:[%s1163] ss:$9 sm:$0xff] %v1071
      %1644 = vst [vmem:[%s1165] ss:$9 sm:$0xff] %v1072
      %1645 = vst [vmem:[%s1167] ss:$9 sm:$0xff] %v1073
      %v1646 = vld [vmem:[#allocation1] sm:$0xff]
      %1647 = vst [vmem:[#allocation1] ss:$9 sm:$0xff] %v1074
      %1648 = vst [vmem:[%s1155] ss:$9 sm:$0xff] %v1075
      %1649 = vst [vmem:[%s1157] ss:$9 sm:$0xff] %v1076
      %1650 = vst [vmem:[%s1159] ss:$9 sm:$0xff] %v1077
      %1651 = vst [vmem:[%s1161] ss:$9 sm:$0xff] %v1078
      %1652 = vst [vmem:[%s1163] ss:$9 sm:$0xff] %v1079
      %1653 = vst [vmem:[%s1165] ss:$9 sm:$0xff] %v1080
      %1654 = vst [vmem:[%s1167] ss:$9 sm:$0xff] %v1081
      %v1655 = vld [vmem:[#allocation1] sm:$0xff]
      %1656 = vst [vmem:[#allocation1] ss:$9 sm:$0xff] %v1082
      %1657 = vst [vmem:[%s1155] ss:$9 sm:$0xff] %v1083
      %1658 = vst [vmem:[%s1157] ss:$9 sm:$0xff] %v1084
      %1659 = vst [vmem:[%s1159] ss:$9 sm:$0xff] %v1085
      %1660 = vst [vmem:[%s1161] ss:$9 sm:$0xff] %v1086
      %1661 = vst [vmem:[%s1163] ss:$9 sm:$0xff] %v1087
      %1662 = vst [vmem:[%s1165] ss:$9 sm:$0xff] %v1088
      %1663 = vst [vmem:[%s1167] ss:$9 sm:$0xff] %v1089
      %v1664 = vld [vmem:[#allocation1] sm:$0xff]
      %1665 = vst [vmem:[#allocation1] ss:$9 sm:$0xff] %v1090
      %1666 = vst [vmem:[%s1155] ss:$9 sm:$0xff] %v1091
      %1667 = vst [vmem:[%s1157] ss:$9 sm:$0xff] %v1092
      %1668 = vst [vmem:[%s1159] ss:$9 sm:$0xff] %v1093
      %1669 = vst [vmem:[%s1161] ss:$9 sm:$0xff] %v1094
      %1670 = vst [vmem:[%s1163] ss:$9 sm:$0xff] %v1095
      %1671 = vst [vmem:[%s1165] ss:$9 sm:$0xff] %v1096
      %1672 = vst [vmem:[%s1167] ss:$9 sm:$0xff] %v1097
      %v1673 = vld [vmem:[#allocation1] sm:$0xff]
      %1674 = vst [vmem:[#allocation1] ss:$9 sm:$0xff] %v1098
      %1675 = vst [vmem:[%s1155] ss:$9 sm:$0xff] %v1099
      %1676 = vst [vmem:[%s1157] ss:$9 sm:$0xff] %v1100
      %1677 = vst [vmem:[%s1159] ss:$9 sm:$0xff] %v1101
      %1678 = vst [vmem:[%s1161] ss:$9 sm:$0xff] %v1102
      %1679 = vst [vmem:[%s1163] ss:$9 sm:$0xff] %v1103
      %1680 = vst [vmem:[%s1165] ss:$9 sm:$0xff] %v1104
      %1681 = vst [vmem:[%s1167] ss:$9 sm:$0xff] %v1105
      %v1682 = vld [vmem:[#allocation1] sm:$0xff]
      %1683 = vst [vmem:[#allocation1] ss:$9 sm:$0xff] %v1106
      %1684 = vst [vmem:[%s1155] ss:$9 sm:$0xff] %v1107
      %1685 = vst [vmem:[%s1157] ss:$9 sm:$0xff] %v1108
      %1686 = vst [vmem:[%s1159] ss:$9 sm:$0xff] %v1109
      %1687 = vst [vmem:[%s1161] ss:$9 sm:$0xff] %v1110
      %1688 = vst [vmem:[%s1163] ss:$9 sm:$0xff] %v1111
      %1689 = vst [vmem:[%s1165] ss:$9 sm:$0xff] %v1112
      %1690 = vst [vmem:[%s1167] ss:$9 sm:$0xff] %v1113
      %v1691 = vld [vmem:[#allocation1] sm:$0xff]
      %1692 = vst [vmem:[#allocation1] ss:$9 sm:$0xff] %v1114
      %1693 = vst [vmem:[%s1155] ss:$9 sm:$0xff] %v1115
      %1694 = vst [vmem:[%s1157] ss:$9 sm:$0xff] %v1116
      %1695 = vst [vmem:[%s1159] ss:$9 sm:$0xff] %v1117
      %1696 = vst [vmem:[%s1161] ss:$9 sm:$0xff] %v1118
      %1697 = vst [vmem:[%s1163] ss:$9 sm:$0xff] %v1119
      %1698 = vst [vmem:[%s1165] ss:$9 sm:$0xff] %v1120
      %1699 = vst [vmem:[%s1167] ss:$9 sm:$0xff] %v1121
      %v1700 = vld [vmem:[#allocation1] sm:$0xff]
      %1701 = vst [vmem:[#allocation1] ss:$9 sm:$0xff] %v1122
      %1702 = vst [vmem:[%s1155] ss:$9 sm:$0xff] %v1123
      %1703 = vst [vmem:[%s1157] ss:$9 sm:$0xff] %v1124
      %1704 = vst [vmem:[%s1159] ss:$9 sm:$0xff] %v1125
      %1705 = vst [vmem:[%s1161] ss:$9 sm:$0xff] %v1126
      %1706 = vst [vmem:[%s1163] ss:$9 sm:$0xff] %v1127
      %1707 = vst [vmem:[%s1165] ss:$9 sm:$0xff] %v1128
      %1708 = vst [vmem:[%s1167] ss:$9 sm:$0xff] %v1129
      %v1709 = vld [vmem:[#allocation1] sm:$0xff]
      %1710 = vst [vmem:[#allocation1] ss:$9 sm:$0xff] %v1130
      %1711 = vst [vmem:[%s1155] ss:$9 sm:$0xff] %v1131
      %1712 = vst [vmem:[%s1157] ss:$9 sm:$0xff] %v1132
      %1713 = vst [vmem:[%s1159] ss:$9 sm:$0xff] %v1133
      %1714 = vst [vmem:[%s1161] ss:$9 sm:$0xff] %v1134
      %1715 = vst [vmem:[%s1163] ss:$9 sm:$0xff] %v1135
      %1716 = vst [vmem:[%s1165] ss:$9 sm:$0xff] %v1136
      %1717 = vst [vmem:[%s1167] ss:$9 sm:$0xff] %v1137
      %v1718 = vld [vmem:[#allocation1] sm:$0xff]
      %1719 = vst [vmem:[#allocation1] ss:$9 sm:$0xff] %v1138
      %1720 = vst [vmem:[%s1155] ss:$9 sm:$0xff] %v1139
      %1721 = vst [vmem:[%s1157] ss:$9 sm:$0xff] %v1140
      %1722 = vst [vmem:[%s1159] ss:$9 sm:$0xff] %v1141
      %1723 = vst [vmem:[%s1161] ss:$9 sm:$0xff] %v1142
      %1724 = vst [vmem:[%s1163] ss:$9 sm:$0xff] %v1143
      %1725 = vst [vmem:[%s1165] ss:$9 sm:$0xff] %v1144
      %1726 = vst [vmem:[%s1167] ss:$9 sm:$0xff] %v1145
      %v1727 = vld [vmem:[#allocation1] sm:$0xff]
      %1728 = vst [vmem:[#allocation1] ss:$9 sm:$0xff] %v1146
      %1729 = vst [vmem:[%s1155] ss:$9 sm:$0xff] %v1147
      %1730 = vst [vmem:[%s1157] ss:$9 sm:$0xff] %v1148
      %1731 = vst [vmem:[%s1159] ss:$9 sm:$0xff] %v1149
      %1732 = vst [vmem:[%s1161] ss:$9 sm:$0xff] %v1150
      %1733 = vst [vmem:[%s1163] ss:$9 sm:$0xff] %v1151
      %1734 = vst [vmem:[%s1165] ss:$9 sm:$0xff] %v1152
      %1735 = vst [vmem:[%s1167] ss:$9 sm:$0xff] %v1153
      %v1736 = vld [vmem:[#allocation1] sm:$0xff]
      %1737 = vset.pattern.permute.xlu0 0
      %1738 = vperm.xlu0 %1737, %v1169
      %v1739 = vpop.permute.xlu0 %1738
      %1740 = vset.pattern.permute.xlu0 0
      %1741 = vperm.xlu0 %1740, %v1178
      %v1742 = vpop.permute.xlu0 %1741
      %1743 = vset.pattern.permute.xlu0 0
      %1744 = vperm.xlu0 %1743, %v1187
      %v1745 = vpop.permute.xlu0 %1744
      %1746 = vset.pattern.permute.xlu0 0
      %1747 = vperm.xlu0 %1746, %v1196
      %v1748 = vpop.permute.xlu0 %1747
      %1749 = vset.pattern.permute.xlu0 0
      %1750 = vperm.xlu0 %1749, %v1205
      %v1751 = vpop.permute.xlu0 %1750
      %1752 = vset.pattern.permute.xlu0 0
      %1753 = vperm.xlu0 %1752, %v1214
      %v1754 = vpop.permute.xlu0 %1753
      %1755 = vset.pattern.permute.xlu0 0
      %1756 = vperm.xlu0 %1755, %v1223
      %v1757 = vpop.permute.xlu0 %1756
      %1758 = vset.pattern.permute.xlu0 0
      %1759 = vperm.xlu0 %1758, %v1232
      %v1760 = vpop.permute.xlu0 %1759
      %1761 = vset.pattern.permute.xlu0 0
      %1762 = vperm.xlu0 %1761, %v1241
      %v1763 = vpop.permute.xlu0 %1762
      %1764 = vset.pattern.permute.xlu0 0
      %1765 = vperm.xlu0 %1764, %v1250
      %v1766 = vpop.permute.xlu0 %1765
      %1767 = vset.pattern.permute.xlu0 0
      %1768 = vperm.xlu0 %1767, %v1259
      %v1769 = vpop.permute.xlu0 %1768
      %1770 = vset.pattern.permute.xlu0 0
      %1771 = vperm.xlu0 %1770, %v1268
      %v1772 = vpop.permute.xlu0 %1771
      %1773 = vset.pattern.permute.xlu0 0
      %1774 = vperm.xlu0 %1773, %v1277
      %v1775 = vpop.permute.xlu0 %1774
      %1776 = vset.pattern.permute.xlu0 0
      %1777 = vperm.xlu0 %1776, %v1286
      %v1778 = vpop.permute.xlu0 %1777
      %1779 = vset.pattern.permute.xlu0 0
      %1780 = vperm.xlu0 %1779, %v1295
      %v1781 = vpop.permute.xlu0 %1780
      %1782 = vset.pattern.permute.xlu0 0
      %1783 = vperm.xlu0 %1782, %v1304
      %v1784 = vpop.permute.xlu0 %1783
      %1785 = vset.pattern.permute.xlu0 0
      %1786 = vperm.xlu0 %1785, %v1313
      %v1787 = vpop.permute.xlu0 %1786
      %1788 = vset.pattern.permute.xlu0 0
      %1789 = vperm.xlu0 %1788, %v1322
      %v1790 = vpop.permute.xlu0 %1789
      %1791 = vset.pattern.permute.xlu0 0
      %1792 = vperm.xlu0 %1791, %v1331
      %v1793 = vpop.permute.xlu0 %1792
      %1794 = vset.pattern.permute.xlu0 0
      %1795 = vperm.xlu0 %1794, %v1340
      %v1796 = vpop.permute.xlu0 %1795
      %1797 = vset.pattern.permute.xlu0 0
      %1798 = vperm.xlu0 %1797, %v1349
      %v1799 = vpop.permute.xlu0 %1798
      %1800 = vset.pattern.permute.xlu0 0
      %1801 = vperm.xlu0 %1800, %v1358
      %v1802 = vpop.permute.xlu0 %1801
      %1803 = vset.pattern.permute.xlu0 0
      %1804 = vperm.xlu0 %1803, %v1367
      %v1805 = vpop.permute.xlu0 %1804
      %1806 = vset.pattern.permute.xlu0 0
      %1807 = vperm.xlu0 %1806, %v1376
      %v1808 = vpop.permute.xlu0 %1807
      %1809 = vset.pattern.permute.xlu0 0
      %1810 = vperm.xlu0 %1809, %v1385
      %v1811 = vpop.permute.xlu0 %1810
      %1812 = vset.pattern.permute.xlu0 0
      %1813 = vperm.xlu0 %1812, %v1394
      %v1814 = vpop.permute.xlu0 %1813
      %1815 = vset.pattern.permute.xlu0 0
      %1816 = vperm.xlu0 %1815, %v1403
      %v1817 = vpop.permute.xlu0 %1816
      %1818 = vset.pattern.permute.xlu0 0
      %1819 = vperm.xlu0 %1818, %v1412
      %v1820 = vpop.permute.xlu0 %1819
      %1821 = vset.pattern.permute.xlu0 0
      %1822 = vperm.xlu0 %1821, %v1421
      %v1823 = vpop.permute.xlu0 %1822
      %1824 = vset.pattern.permute.xlu0 0
      %1825 = vperm.xlu0 %1824, %v1430
      %v1826 = vpop.permute.xlu0 %1825
      %1827 = vset.pattern.permute.xlu0 0
      %1828 = vperm.xlu0 %1827, %v1439
      %v1829 = vpop.permute.xlu0 %1828
      %1830 = vset.pattern.permute.xlu0 0
      %1831 = vperm.xlu0 %1830, %v1448
      %v1832 = vpop.permute.xlu0 %1831
      %1833 = vset.pattern.permute.xlu0 0
      %1834 = vperm.xlu0 %1833, %v1457
      %v1835 = vpop.permute.xlu0 %1834
      %1836 = vset.pattern.permute.xlu0 0
      %1837 = vperm.xlu0 %1836, %v1466
      %v1838 = vpop.permute.xlu0 %1837
      %1839 = vset.pattern.permute.xlu0 0
      %1840 = vperm.xlu0 %1839, %v1475
      %v1841 = vpop.permute.xlu0 %1840
      %1842 = vset.pattern.permute.xlu0 0
      %1843 = vperm.xlu0 %1842, %v1484
      %v1844 = vpop.permute.xlu0 %1843
      %1845 = vset.pattern.permute.xlu0 0
      %1846 = vperm.xlu0 %1845, %v1493
      %v1847 = vpop.permute.xlu0 %1846
      %1848 = vset.pattern.permute.xlu0 0
      %1849 = vperm.xlu0 %1848, %v1502
      %v1850 = vpop.permute.xlu0 %1849
      %1851 = vset.pattern.permute.xlu0 0
      %1852 = vperm.xlu0 %1851, %v1511
      %v1853 = vpop.permute.xlu0 %1852
      %1854 = vset.pattern.permute.xlu0 0
      %1855 = vperm.xlu0 %1854, %v1520
      %v1856 = vpop.permute.xlu0 %1855
      %1857 = vset.pattern.permute.xlu0 0
      %1858 = vperm.xlu0 %1857, %v1529
      %v1859 = vpop.permute.xlu0 %1858
      %1860 = vset.pattern.permute.xlu0 0
      %1861 = vperm.xlu0 %1860, %v1538
      %v1862 = vpop.permute.xlu0 %1861
      %1863 = vset.pattern.permute.xlu0 0
      %1864 = vperm.xlu0 %1863, %v1547
      %v1865 = vpop.permute.xlu0 %1864
      %1866 = vset.pattern.permute.xlu0 0
      %1867 = vperm.xlu0 %1866, %v1556
      %v1868 = vpop.permute.xlu0 %1867
      %1869 = vset.pattern.permute.xlu0 0
      %1870 = vperm.xlu0 %1869, %v1565
      %v1871 = vpop.permute.xlu0 %1870
      %1872 = vset.pattern.permute.xlu0 0
      %1873 = vperm.xlu0 %1872, %v1574
      %v1874 = vpop.permute.xlu0 %1873
      %1875 = vset.pattern.permute.xlu0 0
      %1876 = vperm.xlu0 %1875, %v1583
      %v1877 = vpop.permute.xlu0 %1876
      %1878 = vset.pattern.permute.xlu0 0
      %1879 = vperm.xlu0 %1878, %v1592
      %v1880 = vpop.permute.xlu0 %1879
      %1881 = vset.pattern.permute.xlu0 0
      %1882 = vperm.xlu0 %1881, %v1601
      %v1883 = vpop.permute.xlu0 %1882
      %1884 = vset.pattern.permute.xlu0 0
      %1885 = vperm.xlu0 %1884, %v1610
      %v1886 = vpop.permute.xlu0 %1885
      %1887 = vset.pattern.permute.xlu0 0
      %1888 = vperm.xlu0 %1887, %v1619
      %v1889 = vpop.permute.xlu0 %1888
      %1890 = vset.pattern.permute.xlu0 0
      %1891 = vperm.xlu0 %1890, %v1628
      %v1892 = vpop.permute.xlu0 %1891
      %1893 = vset.pattern.permute.xlu0 0
      %1894 = vperm.xlu0 %1893, %v1637
      %v1895 = vpop.permute.xlu0 %1894
      %1896 = vset.pattern.permute.xlu0 0
      %1897 = vperm.xlu0 %1896, %v1646
      %v1898 = vpop.permute.xlu0 %1897
      %1899 = vset.pattern.permute.xlu0 0
      %1900 = vperm.xlu0 %1899, %v1655
      %v1901 = vpop.permute.xlu0 %1900
      %1902 = vset.pattern.permute.xlu0 0
      %1903 = vperm.xlu0 %1902, %v1664
      %v1904 = vpop.permute.xlu0 %1903
      %1905 = vset.pattern.permute.xlu0 0
      %1906 = vperm.xlu0 %1905, %v1673
      %v1907 = vpop.permute.xlu0 %1906
      %1908 = vset.pattern.permute.xlu0 0
      %1909 = vperm.xlu0 %1908, %v1682
      %v1910 = vpop.permute.xlu0 %1909
      %1911 = vset.pattern.permute.xlu0 0
      %1912 = vperm.xlu0 %1911, %v1691
      %v1913 = vpop.permute.xlu0 %1912
      %1914 = vset.pattern.permute.xlu0 0
      %1915 = vperm.xlu0 %1914, %v1700
      %v1916 = vpop.permute.xlu0 %1915
      %1917 = vset.pattern.permute.xlu0 0
      %1918 = vperm.xlu0 %1917, %v1709
      %v1919 = vpop.permute.xlu0 %1918
      %1920 = vset.pattern.permute.xlu0 0
      %1921 = vperm.xlu0 %1920, %v1718
      %v1922 = vpop.permute.xlu0 %1921
      %1923 = vset.pattern.permute.xlu0 0
      %1924 = vperm.xlu0 %1923, %v1727
      %v1925 = vpop.permute.xlu0 %1924
      %1926 = vset.pattern.permute.xlu0 0
      %1927 = vperm.xlu0 %1926, %v1736
      %v1928 = vpop.permute.xlu0 %1927
      %v1929 = vlaneseq
      %v1930 = vand.u32 %v1929, 127
      %v1931 = vperm.slane %v1739, %v1930
      %v1932 = vadd.s32 %v1930, 4294967288
      %v1933 = vperm.slane %v1742, %v1932
      %vm1934 = vcmask 130112
      %v1935 = vsel %vm1934, %v1933, %v1931
      %v1936 = vadd.s32 %v1930, 4294967280
      %v1937 = vperm.slane %v1745, %v1936
      %vm1938 = vcmask 195712
      %v1939 = vsel %vm1938, %v1937, %v1935
      %v1940 = vadd.s32 %v1930, 4294967272
      %v1941 = vperm.slane %v1748, %v1940
      %vm1942 = vcmask 261312
      %v1943 = vsel %vm1942, %v1941, %v1939
      %v1944 = vadd.s32 %v1930, 4294967264
      %v1945 = vperm.slane %v1751, %v1944
      %vm1946 = vcmask 326912
      %v1947 = vsel %vm1946, %v1945, %v1943
      %v1948 = vadd.s32 %v1930, 4294967256
      %v1949 = vperm.slane %v1754, %v1948
      %vm1950 = vcmask 392512
      %v1951 = vsel %vm1950, %v1949, %v1947
      %v1952 = vadd.s32 %v1930, 4294967248
      %v1953 = vperm.slane %v1757, %v1952
      %vm1954 = vcmask 458112
      %v1955 = vsel %vm1954, %v1953, %v1951
      %v1956 = vadd.s32 %v1930, 4294967240
      %v1957 = vperm.slane %v1760, %v1956
      %vm1958 = vcmask 523712
      %v1959 = vsel %vm1958, %v1957, %v1955
      %v1960 = vadd.s32 %v1930, 4294967232
      %v1961 = vperm.slane %v1763, %v1960
      %vm1962 = vcmask 589312
      %v1963 = vsel %vm1962, %v1961, %v1959
      %v1964 = vadd.s32 %v1930, 4294967224
      %v1965 = vperm.slane %v1766, %v1964
      %vm1966 = vcmask 654912
      %v1967 = vsel %vm1966, %v1965, %v1963
      %v1968 = vadd.s32 %v1930, 4294967216
      %v1969 = vperm.slane %v1769, %v1968
      %vm1970 = vcmask 720512
      %v1971 = vsel %vm1970, %v1969, %v1967
      %v1972 = vadd.s32 %v1930, 4294967208
      %v1973 = vperm.slane %v1772, %v1972
      %vm1974 = vcmask 786112
      %v1975 = vsel %vm1974, %v1973, %v1971
      %v1976 = vadd.s32 %v1930, 4294967200
      %v1977 = vperm.slane %v1775, %v1976
      %vm1978 = vcmask 851712
      %v1979 = vsel %vm1978, %v1977, %v1975
      %v1980 = vadd.s32 %v1930, 4294967192
      %v1981 = vperm.slane %v1778, %v1980
      %vm1982 = vcmask 917312
      %v1983 = vsel %vm1982, %v1981, %v1979
      %v1984 = vadd.s32 %v1930, 4294967184
      %v1985 = vperm.slane %v1781, %v1984
      %vm1986 = vcmask 982912
      %v1987 = vsel %vm1986, %v1985, %v1983
      %v1988 = vadd.s32 %v1930, 4294967176
      %v1989 = vperm.slane %v1784, %v1988
      %vm1990 = vcmask 1048512
      %v1991 = vsel %vm1990, %v1989, %v1987
      %v1992 = vperm.slane %v1787, %v1930
      %v1993 = vperm.slane %v1790, %v1932
      %v1994 = vsel %vm1934, %v1993, %v1992
      %v1995 = vperm.slane %v1793, %v1936
      %v1996 = vsel %vm1938, %v1995, %v1994
      %v1997 = vperm.slane %v1796, %v1940
      %v1998 = vsel %vm1942, %v1997, %v1996
      %v1999 = vperm.slane %v1799, %v1944
      %v2000 = vsel %vm1946, %v1999, %v1998
      %v2001 = vperm.slane %v1802, %v1948
      %v2002 = vsel %vm1950, %v2001, %v2000
      %v2003 = vperm.slane %v1805, %v1952
      %v2004 = vsel %vm1954, %v2003, %v2002
      %v2005 = vperm.slane %v1808, %v1956
      %v2006 = vsel %vm1958, %v2005, %v2004
      %v2007 = vperm.slane %v1811, %v1960
      %v2008 = vsel %vm1962, %v2007, %v2006
      %v2009 = vperm.slane %v1814, %v1964
      %v2010 = vsel %vm1966, %v2009, %v2008
      %v2011 = vperm.slane %v1817, %v1968
      %v2012 = vsel %vm1970, %v2011, %v2010
      %v2013 = vperm.slane %v1820, %v1972
      %v2014 = vsel %vm1974, %v2013, %v2012
      %v2015 = vperm.slane %v1823, %v1976
      %v2016 = vsel %vm1978, %v2015, %v2014
      %v2017 = vperm.slane %v1826, %v1980
      %v2018 = vsel %vm1982, %v2017, %v2016
      %v2019 = vperm.slane %v1829, %v1984
      %v2020 = vsel %vm1986, %v2019, %v2018
      %v2021 = vperm.slane %v1832, %v1988
      %v2022 = vsel %vm1990, %v2021, %v2020
      %v2023 = vperm.slane %v1835, %v1930
      %v2024 = vperm.slane %v1838, %v1932
      %v2025 = vsel %vm1934, %v2024, %v2023
      %v2026 = vperm.slane %v1841, %v1936
      %v2027 = vsel %vm1938, %v2026, %v2025
      %v2028 = vperm.slane %v1844, %v1940
      %v2029 = vsel %vm1942, %v2028, %v2027
      %v2030 = vperm.slane %v1847, %v1944
      %v2031 = vsel %vm1946, %v2030, %v2029
      %v2032 = vperm.slane %v1850, %v1948
      %v2033 = vsel %vm1950, %v2032, %v2031
      %v2034 = vperm.slane %v1853, %v1952
      %v2035 = vsel %vm1954, %v2034, %v2033
      %v2036 = vperm.slane %v1856, %v1956
      %v2037 = vsel %vm1958, %v2036, %v2035
      %v2038 = vperm.slane %v1859, %v1960
      %v2039 = vsel %vm1962, %v2038, %v2037
      %v2040 = vperm.slane %v1862, %v1964
      %v2041 = vsel %vm1966, %v2040, %v2039
      %v2042 = vperm.slane %v1865, %v1968
      %v2043 = vsel %vm1970, %v2042, %v2041
      %v2044 = vperm.slane %v1868, %v1972
      %v2045 = vsel %vm1974, %v2044, %v2043
      %v2046 = vperm.slane %v1871, %v1976
      %v2047 = vsel %vm1978, %v2046, %v2045
      %v2048 = vperm.slane %v1874, %v1980
      %v2049 = vsel %vm1982, %v2048, %v2047
      %v2050 = vperm.slane %v1877, %v1984
      %v2051 = vsel %vm1986, %v2050, %v2049
      %v2052 = vperm.slane %v1880, %v1988
      %v2053 = vsel %vm1990, %v2052, %v2051
      %v2054 = vperm.slane %v1883, %v1930
      %v2055 = vperm.slane %v1886, %v1932
      %v2056 = vsel %vm1934, %v2055, %v2054
      %v2057 = vperm.slane %v1889, %v1936
      %v2058 = vsel %vm1938, %v2057, %v2056
      %v2059 = vperm.slane %v1892, %v1940
      %v2060 = vsel %vm1942, %v2059, %v2058
      %v2061 = vperm.slane %v1895, %v1944
      %v2062 = vsel %vm1946, %v2061, %v2060
      %v2063 = vperm.slane %v1898, %v1948
      %v2064 = vsel %vm1950, %v2063, %v2062
      %v2065 = vperm.slane %v1901, %v1952
      %v2066 = vsel %vm1954, %v2065, %v2064
      %v2067 = vperm.slane %v1904, %v1956
      %v2068 = vsel %vm1958, %v2067, %v2066
      %v2069 = vperm.slane %v1907, %v1960
      %v2070 = vsel %vm1962, %v2069, %v2068
      %v2071 = vperm.slane %v1910, %v1964
      %v2072 = vsel %vm1966, %v2071, %v2070
      %v2073 = vperm.slane %v1913, %v1968
      %v2074 = vsel %vm1970, %v2073, %v2072
      %v2075 = vperm.slane %v1916, %v1972
      %v2076 = vsel %vm1974, %v2075, %v2074
      %v2077 = vperm.slane %v1919, %v1976
      %v2078 = vsel %vm1978, %v2077, %v2076
      %v2079 = vperm.slane %v1922, %v1980
      %v2080 = vsel %vm1982, %v2079, %v2078
      %v2081 = vperm.slane %v1925, %v1984
      %v2082 = vsel %vm1986, %v2081, %v2080
      %v2083 = vperm.slane %v1928, %v1988
      %v2084 = vsel %vm1990, %v2083, %v2082
      %v2085 = vrot.slane %v2022, 7
      %v2086 = vrot.slane %v2053, 6
      %v2087 = vrot.slane %v2084, 5
      %vm2088 = vcmask 1040384
      %v2089 = vsel %vm2088, %v1991, %v2085
      %vm2090 = vcmask 1042434
      %v2091 = vsel %vm2090, %v2086, %v2087
      %vm2092 = vcmask 1041408
      %v2093 = vsel %vm2092, %v2089, %v2091
      %s2095 = sshra.s32 %s54, 7
      %s2096 = sand.u32 %s54, 127
      %s2097 = scalar_lea.vmem [#allocation8], %s2095
      %v2098 = vlaneseq
      %vm2099 = vcmp.ge.s32.totalorder %v2098, 0
      %vm2100 = vcmp.lt.s32.totalorder %v2098, 512
      %vm2101 = vmand %vm2099, %vm2100
      %2102 = vst.msk [vmem:[%s2097] sm:$0xf] %vm2101, %v2093
    $region26: #{tpu_custom_call.1} parent=1 // loop_footer
      %s53 = sadd.s32 1, %s49
    $region27: #{tpu_custom_call.1} parent=1 // loop_footer_branch
      %48 = sbr.rel target = $region23
    $region28: #{tpu_custom_call.1} parent=1 // loop_exit
      _
    // Predicated region
    $region29: #{tpu_custom_call.1} parent=1 // pred_check
      _
    $region30: #{tpu_custom_call.1} parent=1 // pred_check_branch
      %2104 = sbr.rel (0) target = $region32
    $region31: #{tpu_custom_call.1} parent=1 // pred_region
      %2106 = vsyncadd [#allocation5], 0
      %s2108 = sshll.u32 [#allocation8], 4
      %s2109 = int_to_ptr.vmem [resolvable:$true] %s2108
      %s2110 = sshll.u32 %s3, 4
      %s2111 = int_to_ptr.hbm [resolvable:$true] %s2110
      %2113 = dma.vmem_to_hbm [thread:$0]  %s2109, 320, %s2111, [#allocation5]
    $region32: #{tpu_custom_call.1} parent=1 // pred_fallthru
      _
    // Predicated region
    $region33: #{tpu_custom_call.1} parent=1 // pred_check
      _
    $region34: #{tpu_custom_call.1} parent=1 // pred_check_branch
      %2115 = sbr.rel (0) target = $region36
    $region35: #{tpu_custom_call.1} parent=1 // pred_region
      %2117 = dma.done [#allocation5], 320
    $region36: #{tpu_custom_call.1} parent=1 // pred_fallthru
      _
    %2118 = vsyncpa [#allocation4], 1
    %2119 = vsyncpa [#allocation7], 1
    %2120 = vsyncpa [#allocation5], 1

</llo_original>
